<compile_context>
chip_gen: v5e
topology: v5e:2x2
jax: 0.10.0
libtpu: 0.0.40
codegen_flags: <defaults>
</compile_context>

<pallas_src>
import functools

import jax
import jax.numpy as jnp
import numpy as np
from jax.experimental import pallas as pl
from jax.experimental.pallas import tpu as pltpu

_PAD = 8  # zero rows above/below each activation slab in scratch (sublane aligned)


# ----------------------------------------------------------------------------
# The fused Pallas kernel (the entire forward pass, all operands in VMEM).
# ----------------------------------------------------------------------------
def _fastnet_kernel(x_ref, f0_ref, f1_ref, f2_ref, m1_ref, m2_ref,
                    wstem_ref, wb1c1_ref, wb1c2_ref, wb2c1_ref, wb2c2_ref,
                    wds_ref, whead_ref, bias_ref,
                    out_ref, s1_ref, s2_ref):
    dot = lambda a, b: jnp.dot(a, b, preferred_element_type=jnp.float32)

    bh = f0_ref.shape[0]        # B*H   (stage-1 rows)
    bh2 = f2_ref.shape[0]       # B*H/2 (stage-2 rows)
    nb = out_ref.shape[0]       # batch

    m1t, m1b = m1_ref[:, 0:1], m1_ref[:, 1:2]   # stage-1 per-image top/bottom masks
    m2t, m2b = m2_ref[:, 0:1], m2_ref[:, 1:2]   # stage-2 per-image top/bottom masks

    # Scratch slabs: rows [_PAD, _PAD+n) hold data, border rows stay zero so
    # the offset reads below implement the conv's zero padding at slab ends.
    s1_ref[...] = jnp.zeros_like(s1_ref)
    s2_ref[...] = jnp.zeros_like(s2_ref)

    def conv3x3_s1(src_ref, center, w_ref, bias_row, mt, mb, n):
        # One K-concatenated MXU matmul; +/-1 row shifts come from offset
        # reads of the zero-padded scratch (vld/VPU work, off the MXU chain).
        up = src_ref[pl.ds(_PAD - 1, n), :] * mt     # in[r-1], mask h==0 rows
        dn = src_ref[pl.ds(_PAD + 1, n), :] * mb     # in[r+1], mask h==H-1 rows
        lhs = jnp.concatenate([up, center, dn], axis=-1)
        return dot(lhs, w_ref[...]) + bias_row

    # ---- stem: relu(bn(conv3x3(img))) * feat[0] -----------------------------
    x_c = x_ref[pl.ds(_PAD, bh), :]
    y = conv3x3_s1(x_ref, x_c, wstem_ref, bias_ref[0:1, :], m1t, m1b, bh)
    h1 = jnp.maximum(y, 0.0) * f0_ref[...]                         # (B*H, 128)

    # ---- block 1 (nf -> nf, stride 1): relu(bn(conv(relu(bn(conv)))) + h)*f1
    s1_ref[pl.ds(_PAD, bh), :] = h1
    y = conv3x3_s1(s1_ref, h1, wb1c1_ref, bias_ref[1:2, :], m1t, m1b, bh)
    t = jnp.maximum(y, 0.0)
    s1_ref[pl.ds(_PAD, bh), :] = t
    y = conv3x3_s1(s1_ref, t, wb1c2_ref, bias_ref[2:3, :], m1t, m1b, bh)
    h2 = jnp.maximum(y + h1, 0.0) * f1_ref[...]                    # (B*H, 128)

    # ---- block 2 (nf -> 2nf, stride 2) with fused 1x1 downsample shortcut ---
    s1_ref[pl.ds(_PAD, bh), :] = h2
    # stride-2 row selection: output row r needs input rows 2r-1, 2r, 2r+1,
    # read as strided slices of the padded scratch (no selection matmuls).
    up = s1_ref[pl.ds(_PAD - 1, bh2, stride=2), :] * m2t           # h2[2r-1]
    ev = s1_ref[pl.ds(_PAD, bh2, stride=2), :]                     # h2[2r]
    od = s1_ref[pl.ds(_PAD + 1, bh2, stride=2), :]                 # h2[2r+1]
    sc = dot(ev, wds_ref[...]) + bias_ref[5:6, :]                  # bn, no relu
    y = dot(jnp.concatenate([up, ev, od], axis=-1), wb2c1_ref[...]) + bias_ref[3:4, :]
    t = jnp.maximum(y, 0.0)                                        # (B*H/2, 128)
    s2_ref[pl.ds(_PAD, bh2), :] = t
    y = conv3x3_s1(s2_ref, t, wb2c2_ref, bias_ref[4:5, :], m2t, m2b, bh2)
    h3 = jnp.maximum(y + sc, 0.0) * f2_ref[...]                    # (B*H/2, 128)

    # ---- global average pool (sublane reduction) + linear head --------------
    # 1/(H/2 * W/2) and the sum over the w positions packed in the lanes are
    # folded into whead at prep time; output stays lane-dense (128 cols).
    rows = jnp.sum(h3.reshape(nb, bh2 // nb, h3.shape[-1]), axis=1)  # (B, 128)
    out_ref[...] = dot(rows, whead_ref[...]) + bias_ref[6:7, :]      # (B, 128)


# ----------------------------------------------------------------------------
# One-time parameter / operand packing (hoisted out of the per-call path).
# ----------------------------------------------------------------------------
def _band3(w, scale, w_in, w_out, stride):
    """(3,3,cin,cout) conv (+BN scale folded) -> 3 banded (w_in*cin, w_out*cout) mats."""
    kh, kw, cin, cout = w.shape
    wf = (w * scale.reshape(1, 1, 1, cout)).astype(jnp.float32)
    dx = jnp.arange(kw)[:, None, None]
    wi = jnp.arange(w_in)[None, :, None]
    wo = jnp.arange(w_out)[None, None, :]
    sel = (wi == stride * wo + dx - 1).astype(jnp.float32)          # (kw, w_in, w_out)
    mats = jnp.sum(sel[None, :, :, None, :, None] * wf[:, :, None, :, None, :], axis=1)
    return mats.reshape(kh, w_in * cin, w_out * cout)


def _cat_bands(bands, k_pad):
    """(3, K, N) dy-bands -> single (3*k_pad, N) matrix (K padded to the lane width)."""
    kh, k, n = bands.shape
    bands = jnp.pad(bands, ((0, 0), (0, k_pad - k), (0, 0)))
    return bands.reshape(kh * k_pad, n)


def _band1_s2(w, scale, w_in, w_out):
    """(1,1,cin,cout) stride-2 pad-0 conv (+BN scale) -> (w_in*cin, w_out*cout)."""
    _, _, cin, cout = w.shape
    wf = (w[0, 0] * scale.reshape(1, cout)).astype(jnp.float32)      # (cin, cout)
    sel = (jnp.arange(w_in)[:, None] == 2 * jnp.arange(w_out)[None, :]).astype(jnp.float32)
    mats = sel[:, None, :, None] * wf[None, :, None, :]              # (w_in,cin,w_out,cout)
    return mats.reshape(w_in * cin, w_out * cout)


def _boundary_masks(batch, h):
    """(batch*h, 2) f32: col0 = 0 on the first row of each image, col1 = 0 on the last."""
    idx = jnp.arange(batch * h) % h
    top = (idx != 0).astype(jnp.float32)
    bot = (idx != h - 1).astype(jnp.float32)
    return jnp.stack([top, bot], axis=1)


def _lane_bias(bias_c, w_out):
    return jnp.tile(bias_c.reshape(1, -1).astype(jnp.float32), (1, w_out))


def _nchw_to_rows(x):
    b, c, h, w = x.shape
    return jnp.transpose(x, (0, 2, 3, 1)).astype(jnp.float32).reshape(b * h, w * c)


def prepare_operands(params, *, batch, height, width, in_ch):
    """Pack weights/masks ONCE; the per-call forward only repacks activations."""
    nf = params["stem_bn"][0].shape[0]
    nf2 = 2 * nf
    h2, w2 = height // 2, width // 2
    lanes = width * nf                      # lane width of every activation slab
    ncls = params["fc_b"].shape[-1]
    assert height % 2 == 0 and width % 2 == 0
    assert width * in_ch <= lanes and ncls <= lanes and w2 * nf2 == lanes

    wstem = _cat_bands(_band3(params["stem_w"], params["stem_bn"][0], width, width, 1), lanes)
    wb1c1 = _cat_bands(_band3(params["b1c1_w"], params["b1c1_bn"][0], width, width, 1), lanes)
    wb1c2 = _cat_bands(_band3(params["b1c2_w"], params["b1c2_bn"][0], width, width, 1), lanes)
    wb2c1 = _cat_bands(_band3(params["b2c1_w"], params["b2c1_bn"][0], width, w2, 2), lanes)
    wb2c2 = _cat_bands(_band3(params["b2c2_w"], params["b2c2_bn"][0], w2, w2, 1), lanes)
    wds = _band1_s2(params["b2ds_w"], params["b2ds_bn"][0], width, w2)
    # head: GAP scaling folded in, output columns padded to `lanes` (lane-dense)
    whead = jnp.tile(jnp.pad(params["fc_w"].astype(jnp.float32) / float(h2 * w2),
                             ((0, 0), (0, lanes - ncls))), (w2, 1))

    biases = jnp.concatenate([
        _lane_bias(params["stem_bn"][1], width),      # row 0
        _lane_bias(params["b1c1_bn"][1], width),      # row 1
        _lane_bias(params["b1c2_bn"][1], width),      # row 2
        _lane_bias(params["b2c1_bn"][1], w2),         # row 3
        _lane_bias(params["b2c2_bn"][1], w2),         # row 4
        _lane_bias(params["b2ds_bn"][1], w2),         # row 5
        jnp.pad(params["fc_b"].astype(jnp.float32), ((0, 0), (0, lanes - ncls))),  # row 6
        jnp.zeros((1, lanes), jnp.float32),           # row 7 (tile alignment)
    ], axis=0)                                        # (8, lanes)

    return dict(wstem=wstem, wb1c1=wb1c1, wb1c2=wb1c2, wb2c1=wb2c1, wb2c2=wb2c2,
                wds=wds, whead=whead, biases=biases,
                masks1=_boundary_masks(batch, height),
                masks2=_boundary_masks(batch, h2))


# ----------------------------------------------------------------------------
# Deterministic parameter init (synthetic; mirrors the module's shapes).
# ----------------------------------------------------------------------------
def _conv_w(k, kh, kw, cin, cout):
    fan_in = kh * kw * cin
    return jax.random.normal(k, (kh, kw, cin, cout), jnp.float32) * (2.0 / fan_in) ** 0.5


def _bn(kg, kb, c, eps=1e-5):
    gamma = 1.0 + 0.1 * jax.random.normal(kg, (c,), jnp.float32)
    beta = 0.1 * jax.random.normal(kb, (c,), jnp.float32)
    mean = jnp.zeros((c,), jnp.float32)
    var = jnp.ones((c,), jnp.float32)
    scale = gamma / jnp.sqrt(var + eps)
    bias = beta - mean * scale
    return scale, bias


def init_params(key, in_ch=3, nf=8, num_classes=10):
    ks = jax.random.split(key, 20)
    p = {}
    p["stem_w"], p["stem_bn"] = _conv_w(ks[0], 3, 3, in_ch, nf), _bn(ks[1], ks[2], nf)
    p["b1c1_w"], p["b1c1_bn"] = _conv_w(ks[3], 3, 3, nf, nf), _bn(ks[4], ks[5], nf)
    p["b1c2_w"], p["b1c2_bn"] = _conv_w(ks[6], 3, 3, nf, nf), _bn(ks[7], ks[8], nf)
    p["b2c1_w"], p["b2c1_bn"] = _conv_w(ks[9], 3, 3, nf, 2 * nf), _bn(ks[10], ks[11], 2 * nf)
    p["b2c2_w"], p["b2c2_bn"] = _conv_w(ks[12], 3, 3, 2 * nf, 2 * nf), _bn(ks[13], ks[14], 2 * nf)
    p["b2ds_w"], p["b2ds_bn"] = _conv_w(ks[15], 1, 1, nf, 2 * nf), _bn(ks[16], ks[17], 2 * nf)
    p["fc_w"] = jax.random.normal(ks[18], (2 * nf, num_classes), jnp.float32) * 0.1
    p["fc_b"] = 0.1 * jax.random.normal(ks[19], (1, num_classes), jnp.float32)
    return p


# ----------------------------------------------------------------------------
# FastLearner.forward(img, feat) -> logits (single fused pallas_call)
# ----------------------------------------------------------------------------
def fast_learner_forward(packed, img_nchw, feats_nchw, *, num_classes):
    B, cin, H, W = img_nchw.shape
    H2 = H // 2
    lanes = packed["whead"].shape[1]
    bh, bh2 = B * H, B * H2

    # activations / slow features, lane-packed (row = (b, h), lane = w*C + c);
    # the image slab gets zero border rows + lane padding so the kernel's
    # offset reads see the conv's zero padding directly.
    x = _nchw_to_rows(img_nchw)
    x = jnp.pad(x, ((_PAD, _PAD), (0, lanes - x.shape[1])))   # (B*H + 16, lanes)
    f0 = _nchw_to_rows(feats_nchw[0])                         # (B*H, lanes)
    f1 = _nchw_to_rows(feats_nchw[1])                         # (B*H, lanes)
    f2 = _nchw_to_rows(feats_nchw[2])                         # (B*H2, lanes)

    operands = (x, f0, f1, f2, packed["masks1"], packed["masks2"],
                packed["wstem"], packed["wb1c1"], packed["wb1c2"],
                packed["wb2c1"], packed["wb2c2"], packed["wds"],
                packed["whead"], packed["biases"])

    flops = 2 * lanes * lanes * (9 * bh + 7 * bh2 + B)
    bytes_accessed = 4 * (sum(int(np.prod(o.shape)) for o in operands) + B * lanes)

    vmem = pl.BlockSpec(memory_space=pltpu.MemorySpace.VMEM)
    out = pl.pallas_call(
        _fastnet_kernel,
        out_shape=jax.ShapeDtypeStruct((B, lanes), jnp.float32),
        in_specs=[vmem] * len(operands),
        out_specs=vmem,
        scratch_shapes=[pltpu.VMEM((bh + 2 * _PAD, lanes), jnp.float32),
                        pltpu.VMEM((bh2 + 2 * _PAD, lanes), jnp.float32)],
        cost_estimate=pl.CostEstimate(flops=flops, transcendentals=0,
                                      bytes_accessed=bytes_accessed),
        # TODO(synk): on v7x (2 TensorCores) split the batch with grid=(2,) +
        # dimension_semantics=("parallel",) and per-image index maps; on
        # v5e/v6e the grid-less single invocation is strictly better.
    )(*operands)
    return out[:, :num_classes]


# ----------------------------------------------------------------------------
# Pure-JAX reference (same guessed VCResNetFast semantics) for a sanity check.
# ----------------------------------------------------------------------------
def _reference_forward(params, img, feats):
    hp = jax.lax.Precision.HIGHEST

    def conv(x, w, stride, pad):
        return jax.lax.conv_general_dilated(
            x, w, (stride, stride), [(pad, pad), (pad, pad)],
            dimension_numbers=("NCHW", "HWIO", "NCHW"), precision=hp)

    def bn(x, sb):
        s, b = sb
        return x * s.reshape(1, -1, 1, 1) + b.reshape(1, -1, 1, 1)

    h = jax.nn.relu(bn(conv(img, params["stem_w"], 1, 1), params["stem_bn"])) * feats[0]
    y = jax.nn.relu(bn(conv(h, params["b1c1_w"], 1, 1), params["b1c1_bn"]))
    y = bn(conv(y, params["b1c2_w"], 1, 1), params["b1c2_bn"])
    h = jax.nn.relu(y + h) * feats[1]
    sc = bn(conv(h, params["b2ds_w"], 2, 0), params["b2ds_bn"])
    y = jax.nn.relu(bn(conv(h, params["b2c1_w"], 2, 1), params["b2c1_bn"]))
    y = bn(conv(y, params["b2c2_w"], 1, 1), params["b2c2_bn"])
    h = jax.nn.relu(y + sc) * feats[2]
    pooled = jnp.mean(h, axis=(2, 3))
    return jnp.dot(pooled, params["fc_w"], precision=hp) + params["fc_b"]


if __name__ == "__main__":
    key = jax.random.PRNGKey(0)
    kp, ki, kf0, kf1, kf2 = jax.random.split(key, 5)

    B, Cin, H, W = 2, 3, 16, 16
    nf, num_classes = 8, 10

    params = init_params(kp, in_ch=Cin, nf=nf, num_classes=num_classes)
    packed = prepare_operands(params, batch=B, height=H, width=W, in_ch=Cin)  # once

    img = jax.random.normal(ki, (B, Cin, H, W), jnp.float32)               # NCHW
    feats = (jax.random.normal(kf0, (B, nf, H, W), jnp.float32),           # after stem
             jax.random.normal(kf1, (B, nf, H, W), jnp.float32),           # after block1
             jax.random.normal(kf2, (B, 2 * nf, H // 2, W // 2), jnp.float32))  # block2

    fwd = jax.jit(functools.partial(fast_learner_forward, num_classes=num_classes))
    out = jax.block_until_ready(fwd(packed, img, feats))
    assert out.shape == (B, num_classes) and out.dtype == jnp.float32

    ref = _reference_forward(params, img, feats)
    np.testing.assert_allclose(np.asarray(out), np.asarray(ref), rtol=2e-2, atol=2e-2)
    print("KERNEL_OK")
</pallas_src>

<mosaic_0001>
module attributes {stable_mosaic.version = 11 : i64} {
  func.func @_fastnet_kernel(%arg0: memref<48x128xf32, #tpu.memory_space<vmem>>, %arg1: memref<32x128xf32, #tpu.memory_space<vmem>>, %arg2: memref<32x128xf32, #tpu.memory_space<vmem>>, %arg3: memref<16x128xf32, #tpu.memory_space<vmem>>, %arg4: memref<32x2xf32, #tpu.memory_space<vmem>>, %arg5: memref<16x2xf32, #tpu.memory_space<vmem>>, %arg6: memref<384x128xf32, #tpu.memory_space<vmem>>, %arg7: memref<384x128xf32, #tpu.memory_space<vmem>>, %arg8: memref<384x128xf32, #tpu.memory_space<vmem>>, %arg9: memref<384x128xf32, #tpu.memory_space<vmem>>, %arg10: memref<384x128xf32, #tpu.memory_space<vmem>>, %arg11: memref<128x128xf32, #tpu.memory_space<vmem>>, %arg12: memref<128x128xf32, #tpu.memory_space<vmem>>, %arg13: memref<8x128xf32, #tpu.memory_space<vmem>>, %arg14: memref<2x128xf32, #tpu.memory_space<vmem>>, %arg15: memref<48x128xf32, #tpu.memory_space<vmem>>, %arg16: memref<32x128xf32, #tpu.memory_space<vmem>>) attributes {dimension_semantics = [], scalar_prefetch = 0 : i64, scratch_operands = 2 : i64, tpu.core_type = #tpu.core_type<tc>} {
    %c0 = arith.constant 0 : index
    %c0_0 = arith.constant 0 : index
    %0 = vector.load %arg4[%c0, %c0_0] : memref<32x2xf32, #tpu.memory_space<vmem>>, vector<32x1xf32>
    %c0_1 = arith.constant 0 : index
    %c1 = arith.constant 1 : index
    %1 = vector.load %arg4[%c0_1, %c1] : memref<32x2xf32, #tpu.memory_space<vmem>>, vector<32x1xf32>
    %c0_2 = arith.constant 0 : index
    %c0_3 = arith.constant 0 : index
    %2 = vector.load %arg5[%c0_2, %c0_3] : memref<16x2xf32, #tpu.memory_space<vmem>>, vector<16x1xf32>
    %c0_4 = arith.constant 0 : index
    %c1_5 = arith.constant 1 : index
    %3 = vector.load %arg5[%c0_4, %c1_5] : memref<16x2xf32, #tpu.memory_space<vmem>>, vector<16x1xf32>
    %cst = arith.constant 0.000000e+00 : f32
    %4 = vector.broadcast %cst : f32 to vector<48x128xf32>
    %c0_6 = arith.constant 0 : index
    %c0_7 = arith.constant 0 : index
    %5 = vector.load %arg15[%c0_6, %c0_7] : memref<48x128xf32, #tpu.memory_space<vmem>>, vector<48x128xf32>
    tpu.vector_store %arg15[%c0_6, %c0_7], %4 {strides = array<i32>} : memref<48x128xf32, #tpu.memory_space<vmem>>, vector<48x128xf32>,
    %cst_8 = arith.constant 0.000000e+00 : f32
    %6 = vector.broadcast %cst_8 : f32 to vector<32x128xf32>
    %c0_9 = arith.constant 0 : index
    %c0_10 = arith.constant 0 : index
    %7 = vector.load %arg16[%c0_9, %c0_10] : memref<32x128xf32, #tpu.memory_space<vmem>>, vector<32x128xf32>
    tpu.vector_store %arg16[%c0_9, %c0_10], %6 {strides = array<i32>} : memref<32x128xf32, #tpu.memory_space<vmem>>, vector<32x128xf32>,
    %c8 = arith.constant 8 : index
    %c0_11 = arith.constant 0 : index
    %8 = vector.load %arg0[%c8, %c0_11] : memref<48x128xf32, #tpu.memory_space<vmem>>, vector<32x128xf32>
    %c0_12 = arith.constant 0 : index
    %c0_13 = arith.constant 0 : index
    %9 = vector.load %arg13[%c0_12, %c0_13] : memref<8x128xf32, #tpu.memory_space<vmem>>, vector<1x128xf32>
    %c7 = arith.constant 7 : index
    %c0_14 = arith.constant 0 : index
    %10 = vector.load %arg0[%c7, %c0_14] : memref<48x128xf32, #tpu.memory_space<vmem>>, vector<32x128xf32>
    %11 = vector.broadcast %0 : vector<32x1xf32> to vector<32x128xf32>
    %12 = arith.mulf %10, %11 : vector<32x128xf32>
    %c9 = arith.constant 9 : index
    %c0_15 = arith.constant 0 : index
    %13 = vector.load %arg0[%c9, %c0_15] : memref<48x128xf32, #tpu.memory_space<vmem>>, vector<32x128xf32>
    %14 = vector.broadcast %1 : vector<32x1xf32> to vector<32x128xf32>
    %15 = arith.mulf %13, %14 : vector<32x128xf32>
    %16 = tpu.concatenate %12, %8, %15 in 1 : vector<32x128xf32>, vector<32x128xf32>, vector<32x128xf32> -> vector<32x384xf32>
    %c0_16 = arith.constant 0 : index
    %c0_17 = arith.constant 0 : index
    %17 = vector.load %arg6[%c0_16, %c0_17] : memref<384x128xf32, #tpu.memory_space<vmem>>, vector<384x128xf32>
    %cst_18 = arith.constant dense<0.000000e+00> : vector<32x128xf32>
    %18 = tpu.matmul %16, %17, %cst_18 {dimension_numbers = #tpu.dot_dimension_numbers<[1], [0], [0], [1], [0, 0, 1, 1], [], []>} : vector<32x384xf32>, vector<384x128xf32>, vector<32x128xf32> -> vector<32x128xf32>
    %19 = vector.broadcast %9 : vector<1x128xf32> to vector<32x128xf32>
    %20 = arith.addf %18, %19 : vector<32x128xf32>
    %cst_19 = arith.constant 0.000000e+00 : f32
    %21 = vector.broadcast %cst_19 : f32 to vector<32x128xf32>
    %22 = arith.maximumf %20, %21 : vector<32x128xf32>
    %c0_20 = arith.constant 0 : index
    %c0_21 = arith.constant 0 : index
    %23 = vector.load %arg1[%c0_20, %c0_21] : memref<32x128xf32, #tpu.memory_space<vmem>>, vector<32x128xf32>
    %24 = arith.mulf %22, %23 : vector<32x128xf32>
    %c8_22 = arith.constant 8 : index
    %c0_23 = arith.constant 0 : index
    %25 = vector.load %arg15[%c8_22, %c0_23] : memref<48x128xf32, #tpu.memory_space<vmem>>, vector<32x128xf32>
    tpu.vector_store %arg15[%c8_22, %c0_23], %24 {strides = array<i32>} : memref<48x128xf32, #tpu.memory_space<vmem>>, vector<32x128xf32>,
    %c1_24 = arith.constant 1 : index
    %c0_25 = arith.constant 0 : index
    %26 = vector.load %arg13[%c1_24, %c0_25] : memref<8x128xf32, #tpu.memory_space<vmem>>, vector<1x128xf32>
    %c7_26 = arith.constant 7 : index
    %c0_27 = arith.constant 0 : index
    %27 = vector.load %arg15[%c7_26, %c0_27] : memref<48x128xf32, #tpu.memory_space<vmem>>, vector<32x128xf32>
    %28 = vector.broadcast %0 : vector<32x1xf32> to vector<32x128xf32>
    %29 = arith.mulf %27, %28 : vector<32x128xf32>
    %c9_28 = arith.constant 9 : index
    %c0_29 = arith.constant 0 : index
    %30 = vector.load %arg15[%c9_28, %c0_29] : memref<48x128xf32, #tpu.memory_space<vmem>>, vector<32x128xf32>
    %31 = vector.broadcast %1 : vector<32x1xf32> to vector<32x128xf32>
    %32 = arith.mulf %30, %31 : vector<32x128xf32>
    %33 = tpu.concatenate %29, %24, %32 in 1 : vector<32x128xf32>, vector<32x128xf32>, vector<32x128xf32> -> vector<32x384xf32>
    %c0_30 = arith.constant 0 : index
    %c0_31 = arith.constant 0 : index
    %34 = vector.load %arg7[%c0_30, %c0_31] : memref<384x128xf32, #tpu.memory_space<vmem>>, vector<384x128xf32>
    %cst_32 = arith.constant dense<0.000000e+00> : vector<32x128xf32>
    %35 = tpu.matmul %33, %34, %cst_32 {dimension_numbers = #tpu.dot_dimension_numbers<[1], [0], [0], [1], [0, 0, 1, 1], [], []>} : vector<32x384xf32>, vector<384x128xf32>, vector<32x128xf32> -> vector<32x128xf32>
    %36 = vector.broadcast %26 : vector<1x128xf32> to vector<32x128xf32>
    %37 = arith.addf %35, %36 : vector<32x128xf32>
    %cst_33 = arith.constant 0.000000e+00 : f32
    %38 = vector.broadcast %cst_33 : f32 to vector<32x128xf32>
    %39 = arith.maximumf %37, %38 : vector<32x128xf32>
    %c8_34 = arith.constant 8 : index
    %c0_35 = arith.constant 0 : index
    %40 = vector.load %arg15[%c8_34, %c0_35] : memref<48x128xf32, #tpu.memory_space<vmem>>, vector<32x128xf32>
    tpu.vector_store %arg15[%c8_34, %c0_35], %39 {strides = array<i32>} : memref<48x128xf32, #tpu.memory_space<vmem>>, vector<32x128xf32>,
    %c2 = arith.constant 2 : index
    %c0_36 = arith.constant 0 : index
    %41 = vector.load %arg13[%c2, %c0_36] : memref<8x128xf32, #tpu.memory_space<vmem>>, vector<1x128xf32>
    %c7_37 = arith.constant 7 : index
    %c0_38 = arith.constant 0 : index
    %42 = vector.load %arg15[%c7_37, %c0_38] : memref<48x128xf32, #tpu.memory_space<vmem>>, vector<32x128xf32>
    %43 = vector.broadcast %0 : vector<32x1xf32> to vector<32x128xf32>
    %44 = arith.mulf %42, %43 : vector<32x128xf32>
    %c9_39 = arith.constant 9 : index
    %c0_40 = arith.constant 0 : index
    %45 = vector.load %arg15[%c9_39, %c0_40] : memref<48x128xf32, #tpu.memory_space<vmem>>, vector<32x128xf32>
    %46 = vector.broadcast %1 : vector<32x1xf32> to vector<32x128xf32>
    %47 = arith.mulf %45, %46 : vector<32x128xf32>
    %48 = tpu.concatenate %44, %39, %47 in 1 : vector<32x128xf32>, vector<32x128xf32>, vector<32x128xf32> -> vector<32x384xf32>
    %c0_41 = arith.constant 0 : index
    %c0_42 = arith.constant 0 : index
    %49 = vector.load %arg8[%c0_41, %c0_42] : memref<384x128xf32, #tpu.memory_space<vmem>>, vector<384x128xf32>
    %cst_43 = arith.constant dense<0.000000e+00> : vector<32x128xf32>
    %50 = tpu.matmul %48, %49, %cst_43 {dimension_numbers = #tpu.dot_dimension_numbers<[1], [0], [0], [1], [0, 0, 1, 1], [], []>} : vector<32x384xf32>, vector<384x128xf32>, vector<32x128xf32> -> vector<32x128xf32>
    %51 = vector.broadcast %41 : vector<1x128xf32> to vector<32x128xf32>
    %52 = arith.addf %50, %51 : vector<32x128xf32>
    %53 = arith.addf %52, %24 : vector<32x128xf32>
    %cst_44 = arith.constant 0.000000e+00 : f32
    %54 = vector.broadcast %cst_44 : f32 to vector<32x128xf32>
    %55 = arith.maximumf %53, %54 : vector<32x128xf32>
    %c0_45 = arith.constant 0 : index
    %c0_46 = arith.constant 0 : index
    %56 = vector.load %arg2[%c0_45, %c0_46] : memref<32x128xf32, #tpu.memory_space<vmem>>, vector<32x128xf32>
    %57 = arith.mulf %55, %56 : vector<32x128xf32>
    %c8_47 = arith.constant 8 : index
    %c0_48 = arith.constant 0 : index
    %58 = vector.load %arg15[%c8_47, %c0_48] : memref<48x128xf32, #tpu.memory_space<vmem>>, vector<32x128xf32>
    tpu.vector_store %arg15[%c8_47, %c0_48], %57 {strides = array<i32>} : memref<48x128xf32, #tpu.memory_space<vmem>>, vector<32x128xf32>,
    %c7_49 = arith.constant 7 : index
    %c0_50 = arith.constant 0 : index
    %59 = tpu.strided_load %arg15[%c7_49, %c0_50] {strides = array<i32: 2, 1>} : memref<48x128xf32, #tpu.memory_space<vmem>>, vector<16x128xf32>
    %60 = vector.broadcast %2 : vector<16x1xf32> to vector<16x128xf32>
    %61 = arith.mulf %59, %60 : vector<16x128xf32>
    %c8_51 = arith.constant 8 : index
    %c0_52 = arith.constant 0 : index
    %62 = tpu.strided_load %arg15[%c8_51, %c0_52] {strides = array<i32: 2, 1>} : memref<48x128xf32, #tpu.memory_space<vmem>>, vector<16x128xf32>
    %c9_53 = arith.constant 9 : index
    %c0_54 = arith.constant 0 : index
    %63 = tpu.strided_load %arg15[%c9_53, %c0_54] {strides = array<i32: 2, 1>} : memref<48x128xf32, #tpu.memory_space<vmem>>, vector<16x128xf32>
    %c0_55 = arith.constant 0 : index
    %c0_56 = arith.constant 0 : index
    %64 = vector.load %arg11[%c0_55, %c0_56] : memref<128x128xf32, #tpu.memory_space<vmem>>, vector<128x128xf32>
    %cst_57 = arith.constant dense<0.000000e+00> : vector<16x128xf32>
    %65 = tpu.matmul %62, %64, %cst_57 {dimension_numbers = #tpu.dot_dimension_numbers<[1], [0], [0], [1], [0, 0, 1, 1], [], []>} : vector<16x128xf32>, vector<128x128xf32>, vector<16x128xf32> -> vector<16x128xf32>
    %c5 = arith.constant 5 : index
    %c0_58 = arith.constant 0 : index
    %66 = vector.load %arg13[%c5, %c0_58] : memref<8x128xf32, #tpu.memory_space<vmem>>, vector<1x128xf32>
    %67 = vector.broadcast %66 : vector<1x128xf32> to vector<16x128xf32>
    %68 = arith.addf %65, %67 : vector<16x128xf32>
    %69 = tpu.concatenate %61, %62, %63 in 1 : vector<16x128xf32>, vector<16x128xf32>, vector<16x128xf32> -> vector<16x384xf32>
    %c0_59 = arith.constant 0 : index
    %c0_60 = arith.constant 0 : index
    %70 = vector.load %arg9[%c0_59, %c0_60] : memref<384x128xf32, #tpu.memory_space<vmem>>, vector<384x128xf32>
    %cst_61 = arith.constant dense<0.000000e+00> : vector<16x128xf32>
    %71 = tpu.matmul %69, %70, %cst_61 {dimension_numbers = #tpu.dot_dimension_numbers<[1], [0], [0], [1], [0, 0, 1, 1], [], []>} : vector<16x384xf32>, vector<384x128xf32>, vector<16x128xf32> -> vector<16x128xf32>
    %c3 = arith.constant 3 : index
    %c0_62 = arith.constant 0 : index
    %72 = vector.load %arg13[%c3, %c0_62] : memref<8x128xf32, #tpu.memory_space<vmem>>, vector<1x128xf32>
    %73 = vector.broadcast %72 : vector<1x128xf32> to vector<16x128xf32>
    %74 = arith.addf %71, %73 : vector<16x128xf32>
    %cst_63 = arith.constant 0.000000e+00 : f32
    %75 = vector.broadcast %cst_63 : f32 to vector<16x128xf32>
    %76 = arith.maximumf %74, %75 : vector<16x128xf32>
    %c8_64 = arith.constant 8 : index
    %c0_65 = arith.constant 0 : index
    %77 = vector.load %arg16[%c8_64, %c0_65] : memref<32x128xf32, #tpu.memory_space<vmem>>, vector<16x128xf32>
    tpu.vector_store %arg16[%c8_64, %c0_65], %76 {strides = array<i32>} : memref<32x128xf32, #tpu.memory_space<vmem>>, vector<16x128xf32>,
    %c4 = arith.constant 4 : index
    %c0_66 = arith.constant 0 : index
    %78 = vector.load %arg13[%c4, %c0_66] : memref<8x128xf32, #tpu.memory_space<vmem>>, vector<1x128xf32>
    %c7_67 = arith.constant 7 : index
    %c0_68 = arith.constant 0 : index
    %79 = vector.load %arg16[%c7_67, %c0_68] : memref<32x128xf32, #tpu.memory_space<vmem>>, vector<16x128xf32>
    %80 = vector.broadcast %2 : vector<16x1xf32> to vector<16x128xf32>
    %81 = arith.mulf %79, %80 : vector<16x128xf32>
    %c9_69 = arith.constant 9 : index
    %c0_70 = arith.constant 0 : index
    %82 = vector.load %arg16[%c9_69, %c0_70] : memref<32x128xf32, #tpu.memory_space<vmem>>, vector<16x128xf32>
    %83 = vector.broadcast %3 : vector<16x1xf32> to vector<16x128xf32>
    %84 = arith.mulf %82, %83 : vector<16x128xf32>
    %85 = tpu.concatenate %81, %76, %84 in 1 : vector<16x128xf32>, vector<16x128xf32>, vector<16x128xf32> -> vector<16x384xf32>
    %c0_71 = arith.constant 0 : index
    %c0_72 = arith.constant 0 : index
    %86 = vector.load %arg10[%c0_71, %c0_72] : memref<384x128xf32, #tpu.memory_space<vmem>>, vector<384x128xf32>
    %cst_73 = arith.constant dense<0.000000e+00> : vector<16x128xf32>
    %87 = tpu.matmul %85, %86, %cst_73 {dimension_numbers = #tpu.dot_dimension_numbers<[1], [0], [0], [1], [0, 0, 1, 1], [], []>} : vector<16x384xf32>, vector<384x128xf32>, vector<16x128xf32> -> vector<16x128xf32>
    %88 = vector.broadcast %78 : vector<1x128xf32> to vector<16x128xf32>
    %89 = arith.addf %87, %88 : vector<16x128xf32>
    %90 = arith.addf %89, %68 : vector<16x128xf32>
    %cst_74 = arith.constant 0.000000e+00 : f32
    %91 = vector.broadcast %cst_74 : f32 to vector<16x128xf32>
    %92 = arith.maximumf %90, %91 : vector<16x128xf32>
    %c0_75 = arith.constant 0 : index
    %c0_76 = arith.constant 0 : index
    %93 = vector.load %arg3[%c0_75, %c0_76] : memref<16x128xf32, #tpu.memory_space<vmem>>, vector<16x128xf32>
    %94 = arith.mulf %92, %93 : vector<16x128xf32>
    %95 = vector.shape_cast %94 : vector<16x128xf32> to vector<2x8x128xf32>
    %cst_77 = arith.constant dense<0.000000e+00> : vector<2x128xf32>
    %96 = vector.multi_reduction <add>, %95, %cst_77 [1] : vector<2x8x128xf32> to vector<2x128xf32>
    %c0_78 = arith.constant 0 : index
    %c0_79 = arith.constant 0 : index
    %97 = vector.load %arg12[%c0_78, %c0_79] : memref<128x128xf32, #tpu.memory_space<vmem>>, vector<128x128xf32>
    %cst_80 = arith.constant dense<0.000000e+00> : vector<2x128xf32>
    %98 = tpu.matmul %96, %97, %cst_80 {dimension_numbers = #tpu.dot_dimension_numbers<[1], [0], [0], [1], [0, 0, 1, 1], [], []>} : vector<2x128xf32>, vector<128x128xf32>, vector<2x128xf32> -> vector<2x128xf32>
    %c6 = arith.constant 6 : index
    %c0_81 = arith.constant 0 : index
    %99 = vector.load %arg13[%c6, %c0_81] : memref<8x128xf32, #tpu.memory_space<vmem>>, vector<1x128xf32>
    %100 = vector.broadcast %99 : vector<1x128xf32> to vector<2x128xf32>
    %101 = arith.addf %98, %100 : vector<2x128xf32>
    %c0_82 = arith.constant 0 : index
    %c0_83 = arith.constant 0 : index
    %102 = vector.load %arg14[%c0_82, %c0_83] : memref<2x128xf32, #tpu.memory_space<vmem>>, vector<2x128xf32>
    tpu.vector_store %arg14[%c0_82, %c0_83], %101 {strides = array<i32>} : memref<2x128xf32, #tpu.memory_space<vmem>>, vector<2x128xf32>,
    return
  }
}

</mosaic_0001>

<llo_original>
// kernel: fast_learner_forward.1
$region0: #{fast_learner_forward.1}
  #allocation0 [shape = 'u32[]', space=smem, size = 0x4, offset = 0x4, fixed_abs, tag = 'smem constant byte address 0x4 - core index']
  #allocation1 [shape = 'u32[72,128]{1,0:T(1,128)}', space=vmem, size = 0x9000, scoped, tag = 'internal scratch']
  #allocation2 [shape = 'f32[48,128]{1,0:T(8,128)}', space=vmem, size = 0x6000, scoped, tag = 'scratch operand']
  #allocation3 [shape = 'f32[32,128]{1,0:T(8,128)}', space=vmem, size = 0x4000, scoped, tag = 'scratch operand']
  %s0 = inlined_call_operand.vmem [shape: f32[48,128], index: 0, kind: input, shape index: {}]
  %s1 = inlined_call_operand.vmem [shape: f32[32,128], index: 1, kind: input, shape index: {}]
  %s2 = inlined_call_operand.vmem [shape: f32[32,128], index: 2, kind: input, shape index: {}]
  %s3 = inlined_call_operand.vmem [shape: f32[16,128], index: 3, kind: input, shape index: {}]
  %s4 = inlined_call_operand.vmem [shape: f32[32,2], index: 4, kind: input, shape index: {}]
  %s5 = inlined_call_operand.vmem [shape: f32[16,2], index: 5, kind: input, shape index: {}]
  %s6 = inlined_call_operand.vmem [shape: f32[384,128], index: 6, kind: input, shape index: {}]
  %s7 = inlined_call_operand.vmem [shape: f32[384,128], index: 7, kind: input, shape index: {}]
  %s8 = inlined_call_operand.vmem [shape: f32[384,128], index: 8, kind: input, shape index: {}]
  %s9 = inlined_call_operand.vmem [shape: f32[384,128], index: 9, kind: input, shape index: {}]
  %s10 = inlined_call_operand.vmem [shape: f32[384,128], index: 10, kind: input, shape index: {}]
  %s11 = inlined_call_operand.vmem [shape: f32[128,128], index: 11, kind: input, shape index: {}]
  %s12 = inlined_call_operand.vmem [shape: f32[128,128], index: 12, kind: input, shape index: {}]
  %s13 = inlined_call_operand.vmem [shape: f32[8,128], index: 13, kind: input, shape index: {}]
  %s14 = inlined_call_operand.hbm [shape: f32[2,128], index: 14, kind: output, shape index: {}]
  %s15 = sld [smem:[#allocation0]]
  $region66: #{fast_learner_forward.1} parent=0
    _
  %s17 = ssub.s32 1, %s15
  %s18 = scalar_select 0, %s17, %s15
  $region1: #{fast_learner_forward.1} parent=0
    #allocation4 [shape = 'u8[1024]{0}', space=vmem, size = 0x400, scoped, tag = 'output window, operand 0, single buffered']
    #allocation5 [shape = 's32[1]{0}', space=sflag, size = 0x4, scoped, tag = 'scoped memory for fast_learner_forward.1']
    %19 = vsyncpa [#allocation5], 0
    // Predicated region
    $region2: #{fast_learner_forward.1} parent=1 // pred_check
      _
    $region3: #{fast_learner_forward.1} parent=1 // pred_check_branch
      %21 = sbr.rel (0) target = $region5
    $region4: #{fast_learner_forward.1} parent=1 // pred_region
      _
    $region5: #{fast_learner_forward.1} parent=1 // pred_fallthru
      _
    // Predicated region
    $region6: #{fast_learner_forward.1} parent=1 // pred_check
      _
    $region7: #{fast_learner_forward.1} parent=1 // pred_check_branch
      %23 = sbr.rel (0) target = $region9
    $region8: #{fast_learner_forward.1} parent=1 // pred_region
      _
    $region9: #{fast_learner_forward.1} parent=1 // pred_fallthru
      _
    // Predicated region
    $region10: #{fast_learner_forward.1} parent=1 // pred_check
      _
    $region11: #{fast_learner_forward.1} parent=1 // pred_check_branch
      %25 = sbr.rel (0) target = $region13
    $region12: #{fast_learner_forward.1} parent=1 // pred_region
      _
    $region13: #{fast_learner_forward.1} parent=1 // pred_fallthru
      _
    // Predicated region
    $region14: #{fast_learner_forward.1} parent=1 // pred_check
      _
    $region15: #{fast_learner_forward.1} parent=1 // pred_check_branch
      %27 = sbr.rel (0) target = $region17
    $region16: #{fast_learner_forward.1} parent=1 // pred_region
      _
    $region17: #{fast_learner_forward.1} parent=1 // pred_fallthru
      _
    // Predicated region
    $region18: #{fast_learner_forward.1} parent=1 // pred_check
      _
    $region19: #{fast_learner_forward.1} parent=1 // pred_check_branch
      %29 = sbr.rel (0) target = $region21
    $region20: #{fast_learner_forward.1} parent=1 // pred_region
      _
    $region21: #{fast_learner_forward.1} parent=1 // pred_fallthru
      _
    // Predicated region
    $region22: #{fast_learner_forward.1} parent=1 // pred_check
      _
    $region23: #{fast_learner_forward.1} parent=1 // pred_check_branch
      %31 = sbr.rel (0) target = $region25
    $region24: #{fast_learner_forward.1} parent=1 // pred_region
      _
    $region25: #{fast_learner_forward.1} parent=1 // pred_fallthru
      _
    // Predicated region
    $region26: #{fast_learner_forward.1} parent=1 // pred_check
      _
    $region27: #{fast_learner_forward.1} parent=1 // pred_check_branch
      %33 = sbr.rel (0) target = $region29
    $region28: #{fast_learner_forward.1} parent=1 // pred_region
      _
    $region29: #{fast_learner_forward.1} parent=1 // pred_fallthru
      _
    // Predicated region
    $region30: #{fast_learner_forward.1} parent=1 // pred_check
      _
    $region31: #{fast_learner_forward.1} parent=1 // pred_check_branch
      %35 = sbr.rel (0) target = $region33
    $region32: #{fast_learner_forward.1} parent=1 // pred_region
      _
    $region33: #{fast_learner_forward.1} parent=1 // pred_fallthru
      _
    // Predicated region
    $region34: #{fast_learner_forward.1} parent=1 // pred_check
      _
    $region35: #{fast_learner_forward.1} parent=1 // pred_check_branch
      %37 = sbr.rel (0) target = $region37
    $region36: #{fast_learner_forward.1} parent=1 // pred_region
      _
    $region37: #{fast_learner_forward.1} parent=1 // pred_fallthru
      _
    // Predicated region
    $region38: #{fast_learner_forward.1} parent=1 // pred_check
      _
    $region39: #{fast_learner_forward.1} parent=1 // pred_check_branch
      %39 = sbr.rel (0) target = $region41
    $region40: #{fast_learner_forward.1} parent=1 // pred_region
      _
    $region41: #{fast_learner_forward.1} parent=1 // pred_fallthru
      _
    // Predicated region
    $region42: #{fast_learner_forward.1} parent=1 // pred_check
      _
    $region43: #{fast_learner_forward.1} parent=1 // pred_check_branch
      %41 = sbr.rel (0) target = $region45
    $region44: #{fast_learner_forward.1} parent=1 // pred_region
      _
    $region45: #{fast_learner_forward.1} parent=1 // pred_fallthru
      _
    // Predicated region
    $region46: #{fast_learner_forward.1} parent=1 // pred_check
      _
    $region47: #{fast_learner_forward.1} parent=1 // pred_check_branch
      %43 = sbr.rel (0) target = $region49
    $region48: #{fast_learner_forward.1} parent=1 // pred_region
      _
    $region49: #{fast_learner_forward.1} parent=1 // pred_fallthru
      _
    // Predicated region
    $region50: #{fast_learner_forward.1} parent=1 // pred_check
      _
    $region51: #{fast_learner_forward.1} parent=1 // pred_check_branch
      %45 = sbr.rel (0) target = $region53
    $region52: #{fast_learner_forward.1} parent=1 // pred_region
      _
    $region53: #{fast_learner_forward.1} parent=1 // pred_fallthru
      _
    // Predicated region
    $region54: #{fast_learner_forward.1} parent=1 // pred_check
      _
    $region55: #{fast_learner_forward.1} parent=1 // pred_check_branch
      %47 = sbr.rel (0) target = $region57
    $region56: #{fast_learner_forward.1} parent=1 // pred_region
      _
    $region57: #{fast_learner_forward.1} parent=1 // pred_fallthru
      _
    %v48 = vld [vmem:[%s4] sm:$0xff]
    %v49 = vld [vmem:[%s4 + $0x8] sm:$0xff]
    %v50 = vld [vmem:[%s4 + $0x10] sm:$0xff]
    %v51 = vld [vmem:[%s4 + $0x18] sm:$0xff]
    %v52 = vld [vmem:[%s5] sm:$0xff]
    %v53 = vld [vmem:[%s5 + $0x8] sm:$0xff]
    %54 = vst [vmem:[#allocation2] sm:$0xff] 0.0
    %55 = vst [vmem:[#allocation2 + $0x8] sm:$0xff] 0.0
    %56 = vst [vmem:[#allocation2 + $0x10] sm:$0xff] 0.0
    %57 = vst [vmem:[#allocation2 + $0x18] sm:$0xff] 0.0
    %58 = vst [vmem:[#allocation2 + $0x20] sm:$0xff] 0.0
    %59 = vst [vmem:[#allocation2 + $0x28] sm:$0xff] 0.0
    %60 = vst [vmem:[#allocation3] sm:$0xff] 0.0
    %61 = vst [vmem:[#allocation3 + $0x8] sm:$0xff] 0.0
    %62 = vst [vmem:[#allocation3 + $0x10] sm:$0xff] 0.0
    %63 = vst [vmem:[#allocation3 + $0x18] sm:$0xff] 0.0
    %v64 = vld [vmem:[%s0 + $0x8] sm:$0xff]
    %v65 = vld [vmem:[%s0 + $0x10] sm:$0xff]
    %v66 = vld [vmem:[%s0 + $0x18] sm:$0xff]
    %v67 = vld [vmem:[%s0 + $0x20] sm:$0xff]
    %v68 = vld [vmem:[%s13] sm:$0x1]
    %v69 = vld [vmem:[%s0 + $0x7] sm:$0xff]
    %v70 = vld [vmem:[%s0 + $0xf] sm:$0xff]
    %v71 = vld [vmem:[%s0 + $0x17] sm:$0xff]
    %v72 = vld [vmem:[%s0 + $0x1f] sm:$0xff]
    %74 = vset.pattern.permute.xlu0 0
    %75 = vperm.xlu0 %74, %v48
    %v76 = vpop.permute.xlu0 %75
    %79 = vset.pattern.permute.xlu0 0
    %80 = vperm.xlu0 %79, %v49
    %v81 = vpop.permute.xlu0 %80
    %84 = vset.pattern.permute.xlu0 0
    %85 = vperm.xlu0 %84, %v50
    %v86 = vpop.permute.xlu0 %85
    %89 = vset.pattern.permute.xlu0 0
    %90 = vperm.xlu0 %89, %v51
    %v91 = vpop.permute.xlu0 %90
    %v93 = vmul.f32 %v69, %v76
    %v94 = vmul.f32 %v70, %v81
    %v95 = vmul.f32 %v71, %v86
    %v96 = vmul.f32 %v72, %v91
    %v97 = vld [vmem:[%s0 + $0x9] sm:$0xff]
    %v98 = vld [vmem:[%s0 + $0x11] sm:$0xff]
    %v99 = vld [vmem:[%s0 + $0x19] sm:$0xff]
    %v100 = vld [vmem:[%s0 + $0x21] sm:$0xff]
    %101 = vset.pattern.permute.xlu0 1
    %102 = vperm.xlu0 %101, %v48
    %v103 = vpop.permute.xlu0 %102
    %105 = vset.pattern.permute.xlu0 1
    %106 = vperm.xlu0 %105, %v49
    %v107 = vpop.permute.xlu0 %106
    %109 = vset.pattern.permute.xlu0 1
    %110 = vperm.xlu0 %109, %v50
    %v111 = vpop.permute.xlu0 %110
    %113 = vset.pattern.permute.xlu0 1
    %114 = vperm.xlu0 %113, %v51
    %v115 = vpop.permute.xlu0 %114
    %v117 = vmul.f32 %v97, %v103
    %v118 = vmul.f32 %v98, %v107
    %v119 = vmul.f32 %v99, %v111
    %v120 = vmul.f32 %v100, %v115
    %v121 = vld [vmem:[%s6] sm:$0xff]
    %v122 = vld [vmem:[%s6 + $0x8] sm:$0xff]
    %v123 = vld [vmem:[%s6 + $0x10] sm:$0xff]
    %v124 = vld [vmem:[%s6 + $0x18] sm:$0xff]
    %v125 = vld [vmem:[%s6 + $0x20] sm:$0xff]
    %v126 = vld [vmem:[%s6 + $0x28] sm:$0xff]
    %v127 = vld [vmem:[%s6 + $0x30] sm:$0xff]
    %v128 = vld [vmem:[%s6 + $0x38] sm:$0xff]
    %v129 = vld [vmem:[%s6 + $0x40] sm:$0xff]
    %v130 = vld [vmem:[%s6 + $0x48] sm:$0xff]
    %v131 = vld [vmem:[%s6 + $0x50] sm:$0xff]
    %v132 = vld [vmem:[%s6 + $0x58] sm:$0xff]
    %v133 = vld [vmem:[%s6 + $0x60] sm:$0xff]
    %v134 = vld [vmem:[%s6 + $0x68] sm:$0xff]
    %v135 = vld [vmem:[%s6 + $0x70] sm:$0xff]
    %v136 = vld [vmem:[%s6 + $0x78] sm:$0xff]
    %v137 = vld [vmem:[%s6 + $0x80] sm:$0xff]
    %v138 = vld [vmem:[%s6 + $0x88] sm:$0xff]
    %v139 = vld [vmem:[%s6 + $0x90] sm:$0xff]
    %v140 = vld [vmem:[%s6 + $0x98] sm:$0xff]
    %v141 = vld [vmem:[%s6 + $0xa0] sm:$0xff]
    %v142 = vld [vmem:[%s6 + $0xa8] sm:$0xff]
    %v143 = vld [vmem:[%s6 + $0xb0] sm:$0xff]
    %v144 = vld [vmem:[%s6 + $0xb8] sm:$0xff]
    %v145 = vld [vmem:[%s6 + $0xc0] sm:$0xff]
    %v146 = vld [vmem:[%s6 + $0xc8] sm:$0xff]
    %v147 = vld [vmem:[%s6 + $0xd0] sm:$0xff]
    %v148 = vld [vmem:[%s6 + $0xd8] sm:$0xff]
    %v149 = vld [vmem:[%s6 + $0xe0] sm:$0xff]
    %v150 = vld [vmem:[%s6 + $0xe8] sm:$0xff]
    %v151 = vld [vmem:[%s6 + $0xf0] sm:$0xff]
    %v152 = vld [vmem:[%s6 + $0xf8] sm:$0xff]
    %v153 = vld [vmem:[%s6 + $0x100] sm:$0xff]
    %v154 = vld [vmem:[%s6 + $0x108] sm:$0xff]
    %v155 = vld [vmem:[%s6 + $0x110] sm:$0xff]
    %v156 = vld [vmem:[%s6 + $0x118] sm:$0xff]
    %v157 = vld [vmem:[%s6 + $0x120] sm:$0xff]
    %v158 = vld [vmem:[%s6 + $0x128] sm:$0xff]
    %v159 = vld [vmem:[%s6 + $0x130] sm:$0xff]
    %v160 = vld [vmem:[%s6 + $0x138] sm:$0xff]
    %v161 = vld [vmem:[%s6 + $0x140] sm:$0xff]
    %v162 = vld [vmem:[%s6 + $0x148] sm:$0xff]
    %v163 = vld [vmem:[%s6 + $0x150] sm:$0xff]
    %v164 = vld [vmem:[%s6 + $0x158] sm:$0xff]
    %v165 = vld [vmem:[%s6 + $0x160] sm:$0xff]
    %v166 = vld [vmem:[%s6 + $0x168] sm:$0xff]
    %v167 = vld [vmem:[%s6 + $0x170] sm:$0xff]
    %v168 = vld [vmem:[%s6 + $0x178] sm:$0xff]
    %v169 = vperm.slane %v68, 0
    %170 = vmatpush.msra.mxu0 %v136
    %171 = vmatpush.msra.mxu0 %v135
    %172 = vmatpush.msra.mxu0 %v134
    %173 = vmatpush.msra.mxu0 %v133
    %174 = vmatpush.msra.mxu0 %v132
    %175 = vmatpush.msra.mxu0 %v131
    %176 = vmatpush.msra.mxu0 %v130
    %177 = vmatpush.msra.mxu0 %v129
    %178 = vmatpush.msra.mxu0 %v128
    %179 = vmatpush.msra.mxu0 %v127
    %180 = vmatpush.msra.mxu0 %v126
    %181 = vmatpush.msra.mxu0 %v125
    %182 = vmatpush.msra.mxu0 %v124
    %183 = vmatpush.msra.mxu0 %v123
    %184 = vmatpush.msra.mxu0 %v122
    %185 = vmatpush.msra.mxu0 %v121
    %186 = vmatmul.f32.gmra.mxu0 %v93
    %v187 = vpop.f32.mrf.mxu0
    %v188 = vadd.f32 %v169, %v187
    %189 = vmatmul.f32.gmra.mxu0 %v94
    %v190 = vpop.f32.mrf.mxu0
    %v191 = vadd.f32 %v169, %v190
    %192 = vmatmul.f32.gmra.mxu0 %v95
    %v193 = vpop.f32.mrf.mxu0
    %v194 = vadd.f32 %v169, %v193
    %195 = vmatmul.f32.gmra.mxu0 %v96
    %v196 = vpop.f32.mrf.mxu0
    %v197 = vadd.f32 %v169, %v196
    %198 = vdwg.mxu0
    %199 = vmatpush.msra.mxu0 %v152
    %200 = vmatpush.msra.mxu0 %v151
    %201 = vmatpush.msra.mxu0 %v150
    %202 = vmatpush.msra.mxu0 %v149
    %203 = vmatpush.msra.mxu0 %v148
    %204 = vmatpush.msra.mxu0 %v147
    %205 = vmatpush.msra.mxu0 %v146
    %206 = vmatpush.msra.mxu0 %v145
    %207 = vmatpush.msra.mxu0 %v144
    %208 = vmatpush.msra.mxu0 %v143
    %209 = vmatpush.msra.mxu0 %v142
    %210 = vmatpush.msra.mxu0 %v141
    %211 = vmatpush.msra.mxu0 %v140
    %212 = vmatpush.msra.mxu0 %v139
    %213 = vmatpush.msra.mxu0 %v138
    %214 = vmatpush.msra.mxu0 %v137
    %215 = vmatmul.f32.gmra.mxu0 %v64
    %v216 = vpop.f32.mrf.mxu0
    %v217 = vadd.f32 %v188, %v216
    %218 = vmatmul.f32.gmra.mxu0 %v65
    %v219 = vpop.f32.mrf.mxu0
    %v220 = vadd.f32 %v191, %v219
    %221 = vmatmul.f32.gmra.mxu0 %v66
    %v222 = vpop.f32.mrf.mxu0
    %v223 = vadd.f32 %v194, %v222
    %224 = vmatmul.f32.gmra.mxu0 %v67
    %v225 = vpop.f32.mrf.mxu0
    %v226 = vadd.f32 %v197, %v225
    %227 = vdwg.mxu0
    %228 = vmatpush.msra.mxu0 %v168
    %229 = vmatpush.msra.mxu0 %v167
    %230 = vmatpush.msra.mxu0 %v166
    %231 = vmatpush.msra.mxu0 %v165
    %232 = vmatpush.msra.mxu0 %v164
    %233 = vmatpush.msra.mxu0 %v163
    %234 = vmatpush.msra.mxu0 %v162
    %235 = vmatpush.msra.mxu0 %v161
    %236 = vmatpush.msra.mxu0 %v160
    %237 = vmatpush.msra.mxu0 %v159
    %238 = vmatpush.msra.mxu0 %v158
    %239 = vmatpush.msra.mxu0 %v157
    %240 = vmatpush.msra.mxu0 %v156
    %241 = vmatpush.msra.mxu0 %v155
    %242 = vmatpush.msra.mxu0 %v154
    %243 = vmatpush.msra.mxu0 %v153
    %244 = vmatmul.f32.gmra.mxu0 %v117
    %v245 = vpop.f32.mrf.mxu0
    %v246 = vadd.f32 %v217, %v245
    %247 = vmatmul.f32.gmra.mxu0 %v118
    %v248 = vpop.f32.mrf.mxu0
    %v249 = vadd.f32 %v220, %v248
    %250 = vmatmul.f32.gmra.mxu0 %v119
    %v251 = vpop.f32.mrf.mxu0
    %v252 = vadd.f32 %v223, %v251
    %253 = vmatmul.f32.gmra.mxu0 %v120
    %v254 = vpop.f32.mrf.mxu0
    %v255 = vadd.f32 %v226, %v254
    %256 = vdwg.mxu0
    %v257 = vmax.f32 %v246, 0.0
    %v258 = vmax.f32 %v249, 0.0
    %v259 = vmax.f32 %v252, 0.0
    %v260 = vmax.f32 %v255, 0.0
    %v261 = vld [vmem:[%s1] sm:$0xff]
    %v262 = vld [vmem:[%s1 + $0x8] sm:$0xff]
    %v263 = vld [vmem:[%s1 + $0x10] sm:$0xff]
    %v264 = vld [vmem:[%s1 + $0x18] sm:$0xff]
    %v265 = vmul.f32 %v257, %v261
    %v266 = vmul.f32 %v258, %v262
    %v267 = vmul.f32 %v259, %v263
    %v268 = vmul.f32 %v260, %v264
    %269 = vst [vmem:[#allocation2 + $0x8] sm:$0xff] %v265
    %270 = vst [vmem:[#allocation2 + $0x10] sm:$0xff] %v266
    %271 = vst [vmem:[#allocation2 + $0x18] sm:$0xff] %v267
    %272 = vst [vmem:[#allocation2 + $0x20] sm:$0xff] %v268
    %v273 = vld [vmem:[%s13 + $0x1] sm:$0x1]
    %v274 = vld [vmem:[#allocation2 + $0x7] sm:$0xff]
    %v275 = vld [vmem:[#allocation2 + $0xf] sm:$0xff]
    %v276 = vld [vmem:[#allocation2 + $0x17] sm:$0xff]
    %v277 = vld [vmem:[#allocation2 + $0x1f] sm:$0xff]
    %v278 = vmul.f32 %v274, %v76
    %v279 = vmul.f32 %v275, %v81
    %v280 = vmul.f32 %v276, %v86
    %v281 = vmul.f32 %v277, %v91
    %v282 = vld [vmem:[#allocation2 + $0x9] sm:$0xff]
    %v283 = vld [vmem:[#allocation2 + $0x11] sm:$0xff]
    %v284 = vld [vmem:[#allocation2 + $0x19] sm:$0xff]
    %v285 = vld [vmem:[#allocation2 + $0x21] sm:$0xff]
    %v286 = vmul.f32 %v282, %v103
    %v287 = vmul.f32 %v283, %v107
    %v288 = vmul.f32 %v284, %v111
    %v289 = vmul.f32 %v285, %v115
    %v290 = vld [vmem:[%s7] sm:$0xff]
    %v291 = vld [vmem:[%s7 + $0x8] sm:$0xff]
    %v292 = vld [vmem:[%s7 + $0x10] sm:$0xff]
    %v293 = vld [vmem:[%s7 + $0x18] sm:$0xff]
    %v294 = vld [vmem:[%s7 + $0x20] sm:$0xff]
    %v295 = vld [vmem:[%s7 + $0x28] sm:$0xff]
    %v296 = vld [vmem:[%s7 + $0x30] sm:$0xff]
    %v297 = vld [vmem:[%s7 + $0x38] sm:$0xff]
    %v298 = vld [vmem:[%s7 + $0x40] sm:$0xff]
    %v299 = vld [vmem:[%s7 + $0x48] sm:$0xff]
    %v300 = vld [vmem:[%s7 + $0x50] sm:$0xff]
    %v301 = vld [vmem:[%s7 + $0x58] sm:$0xff]
    %v302 = vld [vmem:[%s7 + $0x60] sm:$0xff]
    %v303 = vld [vmem:[%s7 + $0x68] sm:$0xff]
    %v304 = vld [vmem:[%s7 + $0x70] sm:$0xff]
    %v305 = vld [vmem:[%s7 + $0x78] sm:$0xff]
    %v306 = vld [vmem:[%s7 + $0x80] sm:$0xff]
    %v307 = vld [vmem:[%s7 + $0x88] sm:$0xff]
    %v308 = vld [vmem:[%s7 + $0x90] sm:$0xff]
    %v309 = vld [vmem:[%s7 + $0x98] sm:$0xff]
    %v310 = vld [vmem:[%s7 + $0xa0] sm:$0xff]
    %v311 = vld [vmem:[%s7 + $0xa8] sm:$0xff]
    %v312 = vld [vmem:[%s7 + $0xb0] sm:$0xff]
    %v313 = vld [vmem:[%s7 + $0xb8] sm:$0xff]
    %v314 = vld [vmem:[%s7 + $0xc0] sm:$0xff]
    %v315 = vld [vmem:[%s7 + $0xc8] sm:$0xff]
    %v316 = vld [vmem:[%s7 + $0xd0] sm:$0xff]
    %v317 = vld [vmem:[%s7 + $0xd8] sm:$0xff]
    %v318 = vld [vmem:[%s7 + $0xe0] sm:$0xff]
    %v319 = vld [vmem:[%s7 + $0xe8] sm:$0xff]
    %v320 = vld [vmem:[%s7 + $0xf0] sm:$0xff]
    %v321 = vld [vmem:[%s7 + $0xf8] sm:$0xff]
    %v322 = vld [vmem:[%s7 + $0x100] sm:$0xff]
    %v323 = vld [vmem:[%s7 + $0x108] sm:$0xff]
    %v324 = vld [vmem:[%s7 + $0x110] sm:$0xff]
    %v325 = vld [vmem:[%s7 + $0x118] sm:$0xff]
    %v326 = vld [vmem:[%s7 + $0x120] sm:$0xff]
    %v327 = vld [vmem:[%s7 + $0x128] sm:$0xff]
    %v328 = vld [vmem:[%s7 + $0x130] sm:$0xff]
    %v329 = vld [vmem:[%s7 + $0x138] sm:$0xff]
    %v330 = vld [vmem:[%s7 + $0x140] sm:$0xff]
    %v331 = vld [vmem:[%s7 + $0x148] sm:$0xff]
    %v332 = vld [vmem:[%s7 + $0x150] sm:$0xff]
    %v333 = vld [vmem:[%s7 + $0x158] sm:$0xff]
    %v334 = vld [vmem:[%s7 + $0x160] sm:$0xff]
    %v335 = vld [vmem:[%s7 + $0x168] sm:$0xff]
    %v336 = vld [vmem:[%s7 + $0x170] sm:$0xff]
    %v337 = vld [vmem:[%s7 + $0x178] sm:$0xff]
    %v338 = vperm.slane %v273, 0
    %339 = vmatpush.msra.mxu0 %v305
    %340 = vmatpush.msra.mxu0 %v304
    %341 = vmatpush.msra.mxu0 %v303
    %342 = vmatpush.msra.mxu0 %v302
    %343 = vmatpush.msra.mxu0 %v301
    %344 = vmatpush.msra.mxu0 %v300
    %345 = vmatpush.msra.mxu0 %v299
    %346 = vmatpush.msra.mxu0 %v298
    %347 = vmatpush.msra.mxu0 %v297
    %348 = vmatpush.msra.mxu0 %v296
    %349 = vmatpush.msra.mxu0 %v295
    %350 = vmatpush.msra.mxu0 %v294
    %351 = vmatpush.msra.mxu0 %v293
    %352 = vmatpush.msra.mxu0 %v292
    %353 = vmatpush.msra.mxu0 %v291
    %354 = vmatpush.msra.mxu0 %v290
    %355 = vmatmul.f32.gmra.mxu0 %v278
    %v356 = vpop.f32.mrf.mxu0
    %v357 = vadd.f32 %v338, %v356
    %358 = vmatmul.f32.gmra.mxu0 %v279
    %v359 = vpop.f32.mrf.mxu0
    %v360 = vadd.f32 %v338, %v359
    %361 = vmatmul.f32.gmra.mxu0 %v280
    %v362 = vpop.f32.mrf.mxu0
    %v363 = vadd.f32 %v338, %v362
    %364 = vmatmul.f32.gmra.mxu0 %v281
    %v365 = vpop.f32.mrf.mxu0
    %v366 = vadd.f32 %v338, %v365
    %367 = vdwg.mxu0
    %368 = vmatpush.msra.mxu0 %v321
    %369 = vmatpush.msra.mxu0 %v320
    %370 = vmatpush.msra.mxu0 %v319
    %371 = vmatpush.msra.mxu0 %v318
    %372 = vmatpush.msra.mxu0 %v317
    %373 = vmatpush.msra.mxu0 %v316
    %374 = vmatpush.msra.mxu0 %v315
    %375 = vmatpush.msra.mxu0 %v314
    %376 = vmatpush.msra.mxu0 %v313
    %377 = vmatpush.msra.mxu0 %v312
    %378 = vmatpush.msra.mxu0 %v311
    %379 = vmatpush.msra.mxu0 %v310
    %380 = vmatpush.msra.mxu0 %v309
    %381 = vmatpush.msra.mxu0 %v308
    %382 = vmatpush.msra.mxu0 %v307
    %383 = vmatpush.msra.mxu0 %v306
    %384 = vmatmul.f32.gmra.mxu0 %v265
    %v385 = vpop.f32.mrf.mxu0
    %v386 = vadd.f32 %v357, %v385
    %387 = vmatmul.f32.gmra.mxu0 %v266
    %v388 = vpop.f32.mrf.mxu0
    %v389 = vadd.f32 %v360, %v388
    %390 = vmatmul.f32.gmra.mxu0 %v267
    %v391 = vpop.f32.mrf.mxu0
    %v392 = vadd.f32 %v363, %v391
    %393 = vmatmul.f32.gmra.mxu0 %v268
    %v394 = vpop.f32.mrf.mxu0
    %v395 = vadd.f32 %v366, %v394
    %396 = vdwg.mxu0
    %397 = vmatpush.msra.mxu0 %v337
    %398 = vmatpush.msra.mxu0 %v336
    %399 = vmatpush.msra.mxu0 %v335
    %400 = vmatpush.msra.mxu0 %v334
    %401 = vmatpush.msra.mxu0 %v333
    %402 = vmatpush.msra.mxu0 %v332
    %403 = vmatpush.msra.mxu0 %v331
    %404 = vmatpush.msra.mxu0 %v330
    %405 = vmatpush.msra.mxu0 %v329
    %406 = vmatpush.msra.mxu0 %v328
    %407 = vmatpush.msra.mxu0 %v327
    %408 = vmatpush.msra.mxu0 %v326
    %409 = vmatpush.msra.mxu0 %v325
    %410 = vmatpush.msra.mxu0 %v324
    %411 = vmatpush.msra.mxu0 %v323
    %412 = vmatpush.msra.mxu0 %v322
    %413 = vmatmul.f32.gmra.mxu0 %v286
    %v414 = vpop.f32.mrf.mxu0
    %v415 = vadd.f32 %v386, %v414
    %416 = vmatmul.f32.gmra.mxu0 %v287
    %v417 = vpop.f32.mrf.mxu0
    %v418 = vadd.f32 %v389, %v417
    %419 = vmatmul.f32.gmra.mxu0 %v288
    %v420 = vpop.f32.mrf.mxu0
    %v421 = vadd.f32 %v392, %v420
    %422 = vmatmul.f32.gmra.mxu0 %v289
    %v423 = vpop.f32.mrf.mxu0
    %v424 = vadd.f32 %v395, %v423
    %425 = vdwg.mxu0
    %v426 = vmax.f32 %v415, 0.0
    %v427 = vmax.f32 %v418, 0.0
    %v428 = vmax.f32 %v421, 0.0
    %v429 = vmax.f32 %v424, 0.0
    %430 = vst [vmem:[#allocation2 + $0x8] sm:$0xff] %v426
    %431 = vst [vmem:[#allocation2 + $0x10] sm:$0xff] %v427
    %432 = vst [vmem:[#allocation2 + $0x18] sm:$0xff] %v428
    %433 = vst [vmem:[#allocation2 + $0x20] sm:$0xff] %v429
    %v434 = vld [vmem:[%s13 + $0x2] sm:$0x1]
    %v435 = vld [vmem:[#allocation2 + $0x7] sm:$0xff]
    %v436 = vld [vmem:[#allocation2 + $0xf] sm:$0xff]
    %v437 = vld [vmem:[#allocation2 + $0x17] sm:$0xff]
    %v438 = vld [vmem:[#allocation2 + $0x1f] sm:$0xff]
    %v439 = vmul.f32 %v435, %v76
    %v440 = vmul.f32 %v436, %v81
    %v441 = vmul.f32 %v437, %v86
    %v442 = vmul.f32 %v438, %v91
    %v443 = vld [vmem:[#allocation2 + $0x9] sm:$0xff]
    %v444 = vld [vmem:[#allocation2 + $0x11] sm:$0xff]
    %v445 = vld [vmem:[#allocation2 + $0x19] sm:$0xff]
    %v446 = vld [vmem:[#allocation2 + $0x21] sm:$0xff]
    %v447 = vmul.f32 %v443, %v103
    %v448 = vmul.f32 %v444, %v107
    %v449 = vmul.f32 %v445, %v111
    %v450 = vmul.f32 %v446, %v115
    %v451 = vld [vmem:[%s8] sm:$0xff]
    %v452 = vld [vmem:[%s8 + $0x8] sm:$0xff]
    %v453 = vld [vmem:[%s8 + $0x10] sm:$0xff]
    %v454 = vld [vmem:[%s8 + $0x18] sm:$0xff]
    %v455 = vld [vmem:[%s8 + $0x20] sm:$0xff]
    %v456 = vld [vmem:[%s8 + $0x28] sm:$0xff]
    %v457 = vld [vmem:[%s8 + $0x30] sm:$0xff]
    %v458 = vld [vmem:[%s8 + $0x38] sm:$0xff]
    %v459 = vld [vmem:[%s8 + $0x40] sm:$0xff]
    %v460 = vld [vmem:[%s8 + $0x48] sm:$0xff]
    %v461 = vld [vmem:[%s8 + $0x50] sm:$0xff]
    %v462 = vld [vmem:[%s8 + $0x58] sm:$0xff]
    %v463 = vld [vmem:[%s8 + $0x60] sm:$0xff]
    %v464 = vld [vmem:[%s8 + $0x68] sm:$0xff]
    %v465 = vld [vmem:[%s8 + $0x70] sm:$0xff]
    %v466 = vld [vmem:[%s8 + $0x78] sm:$0xff]
    %v467 = vld [vmem:[%s8 + $0x80] sm:$0xff]
    %v468 = vld [vmem:[%s8 + $0x88] sm:$0xff]
    %v469 = vld [vmem:[%s8 + $0x90] sm:$0xff]
    %v470 = vld [vmem:[%s8 + $0x98] sm:$0xff]
    %v471 = vld [vmem:[%s8 + $0xa0] sm:$0xff]
    %v472 = vld [vmem:[%s8 + $0xa8] sm:$0xff]
    %v473 = vld [vmem:[%s8 + $0xb0] sm:$0xff]
    %v474 = vld [vmem:[%s8 + $0xb8] sm:$0xff]
    %v475 = vld [vmem:[%s8 + $0xc0] sm:$0xff]
    %v476 = vld [vmem:[%s8 + $0xc8] sm:$0xff]
    %v477 = vld [vmem:[%s8 + $0xd0] sm:$0xff]
    %v478 = vld [vmem:[%s8 + $0xd8] sm:$0xff]
    %v479 = vld [vmem:[%s8 + $0xe0] sm:$0xff]
    %v480 = vld [vmem:[%s8 + $0xe8] sm:$0xff]
    %v481 = vld [vmem:[%s8 + $0xf0] sm:$0xff]
    %v482 = vld [vmem:[%s8 + $0xf8] sm:$0xff]
    %v483 = vld [vmem:[%s8 + $0x100] sm:$0xff]
    %v484 = vld [vmem:[%s8 + $0x108] sm:$0xff]
    %v485 = vld [vmem:[%s8 + $0x110] sm:$0xff]
    %v486 = vld [vmem:[%s8 + $0x118] sm:$0xff]
    %v487 = vld [vmem:[%s8 + $0x120] sm:$0xff]
    %v488 = vld [vmem:[%s8 + $0x128] sm:$0xff]
    %v489 = vld [vmem:[%s8 + $0x130] sm:$0xff]
    %v490 = vld [vmem:[%s8 + $0x138] sm:$0xff]
    %v491 = vld [vmem:[%s8 + $0x140] sm:$0xff]
    %v492 = vld [vmem:[%s8 + $0x148] sm:$0xff]
    %v493 = vld [vmem:[%s8 + $0x150] sm:$0xff]
    %v494 = vld [vmem:[%s8 + $0x158] sm:$0xff]
    %v495 = vld [vmem:[%s8 + $0x160] sm:$0xff]
    %v496 = vld [vmem:[%s8 + $0x168] sm:$0xff]
    %v497 = vld [vmem:[%s8 + $0x170] sm:$0xff]
    %v498 = vld [vmem:[%s8 + $0x178] sm:$0xff]
    %v499 = vperm.slane %v434, 0
    %500 = vmatpush.msra.mxu0 %v466
    %501 = vmatpush.msra.mxu0 %v465
    %502 = vmatpush.msra.mxu0 %v464
    %503 = vmatpush.msra.mxu0 %v463
    %504 = vmatpush.msra.mxu0 %v462
    %505 = vmatpush.msra.mxu0 %v461
    %506 = vmatpush.msra.mxu0 %v460
    %507 = vmatpush.msra.mxu0 %v459
    %508 = vmatpush.msra.mxu0 %v458
    %509 = vmatpush.msra.mxu0 %v457
    %510 = vmatpush.msra.mxu0 %v456
    %511 = vmatpush.msra.mxu0 %v455
    %512 = vmatpush.msra.mxu0 %v454
    %513 = vmatpush.msra.mxu0 %v453
    %514 = vmatpush.msra.mxu0 %v452
    %515 = vmatpush.msra.mxu0 %v451
    %516 = vmatmul.f32.gmra.mxu0 %v439
    %v517 = vpop.f32.mrf.mxu0
    %v518 = vadd.f32 %v499, %v517
    %519 = vmatmul.f32.gmra.mxu0 %v440
    %v520 = vpop.f32.mrf.mxu0
    %v521 = vadd.f32 %v499, %v520
    %522 = vmatmul.f32.gmra.mxu0 %v441
    %v523 = vpop.f32.mrf.mxu0
    %v524 = vadd.f32 %v499, %v523
    %525 = vmatmul.f32.gmra.mxu0 %v442
    %v526 = vpop.f32.mrf.mxu0
    %v527 = vadd.f32 %v499, %v526
    %528 = vdwg.mxu0
    %529 = vmatpush.msra.mxu0 %v482
    %530 = vmatpush.msra.mxu0 %v481
    %531 = vmatpush.msra.mxu0 %v480
    %532 = vmatpush.msra.mxu0 %v479
    %533 = vmatpush.msra.mxu0 %v478
    %534 = vmatpush.msra.mxu0 %v477
    %535 = vmatpush.msra.mxu0 %v476
    %536 = vmatpush.msra.mxu0 %v475
    %537 = vmatpush.msra.mxu0 %v474
    %538 = vmatpush.msra.mxu0 %v473
    %539 = vmatpush.msra.mxu0 %v472
    %540 = vmatpush.msra.mxu0 %v471
    %541 = vmatpush.msra.mxu0 %v470
    %542 = vmatpush.msra.mxu0 %v469
    %543 = vmatpush.msra.mxu0 %v468
    %544 = vmatpush.msra.mxu0 %v467
    %545 = vmatmul.f32.gmra.mxu0 %v426
    %v546 = vpop.f32.mrf.mxu0
    %v547 = vadd.f32 %v518, %v546
    %548 = vmatmul.f32.gmra.mxu0 %v427
    %v549 = vpop.f32.mrf.mxu0
    %v550 = vadd.f32 %v521, %v549
    %551 = vmatmul.f32.gmra.mxu0 %v428
    %v552 = vpop.f32.mrf.mxu0
    %v553 = vadd.f32 %v524, %v552
    %554 = vmatmul.f32.gmra.mxu0 %v429
    %v555 = vpop.f32.mrf.mxu0
    %v556 = vadd.f32 %v527, %v555
    %557 = vdwg.mxu0
    %558 = vmatpush.msra.mxu0 %v498
    %559 = vmatpush.msra.mxu0 %v497
    %560 = vmatpush.msra.mxu0 %v496
    %561 = vmatpush.msra.mxu0 %v495
    %562 = vmatpush.msra.mxu0 %v494
    %563 = vmatpush.msra.mxu0 %v493
    %564 = vmatpush.msra.mxu0 %v492
    %565 = vmatpush.msra.mxu0 %v491
    %566 = vmatpush.msra.mxu0 %v490
    %567 = vmatpush.msra.mxu0 %v489
    %568 = vmatpush.msra.mxu0 %v488
    %569 = vmatpush.msra.mxu0 %v487
    %570 = vmatpush.msra.mxu0 %v486
    %571 = vmatpush.msra.mxu0 %v485
    %572 = vmatpush.msra.mxu0 %v484
    %573 = vmatpush.msra.mxu0 %v483
    %574 = vmatmul.f32.gmra.mxu0 %v447
    %v575 = vpop.f32.mrf.mxu0
    %v576 = vadd.f32 %v547, %v575
    %577 = vmatmul.f32.gmra.mxu0 %v448
    %v578 = vpop.f32.mrf.mxu0
    %v579 = vadd.f32 %v550, %v578
    %580 = vmatmul.f32.gmra.mxu0 %v449
    %v581 = vpop.f32.mrf.mxu0
    %v582 = vadd.f32 %v553, %v581
    %583 = vmatmul.f32.gmra.mxu0 %v450
    %v584 = vpop.f32.mrf.mxu0
    %v585 = vadd.f32 %v556, %v584
    %586 = vdwg.mxu0
    %v587 = vadd.f32 %v576, %v265
    %v588 = vadd.f32 %v579, %v266
    %v589 = vadd.f32 %v582, %v267
    %v590 = vadd.f32 %v585, %v268
    %v591 = vmax.f32 %v587, 0.0
    %v592 = vmax.f32 %v588, 0.0
    %v593 = vmax.f32 %v589, 0.0
    %v594 = vmax.f32 %v590, 0.0
    %v595 = vld [vmem:[%s2] sm:$0xff]
    %v596 = vld [vmem:[%s2 + $0x8] sm:$0xff]
    %v597 = vld [vmem:[%s2 + $0x10] sm:$0xff]
    %v598 = vld [vmem:[%s2 + $0x18] sm:$0xff]
    %v599 = vmul.f32 %v591, %v595
    %v600 = vmul.f32 %v592, %v596
    %v601 = vmul.f32 %v593, %v597
    %v602 = vmul.f32 %v594, %v598
    %603 = vst [vmem:[#allocation2 + $0x8] sm:$0xff] %v599
    %604 = vst [vmem:[#allocation2 + $0x10] sm:$0xff] %v600
    %605 = vst [vmem:[#allocation2 + $0x18] sm:$0xff] %v601
    %606 = vst [vmem:[#allocation2 + $0x20] sm:$0xff] %v602
    %s607 = scalar_lea.vmem [#allocation2], 7
    %v608 = vld [vmem:[%s607] ss:$2 sm:$0xff]
    %s609 = scalar_lea.vmem [#allocation2], 23
    %v610 = vld [vmem:[%s609] ss:$2 sm:$0xff]
    %612 = vset.pattern.permute.xlu0 0
    %613 = vperm.xlu0 %612, %v52
    %v614 = vpop.permute.xlu0 %613
    %617 = vset.pattern.permute.xlu0 0
    %618 = vperm.xlu0 %617, %v53
    %v619 = vpop.permute.xlu0 %618
    %v621 = vmul.f32 %v608, %v614
    %v622 = vmul.f32 %v610, %v619
    %s623 = scalar_lea.vmem [#allocation2], 8
    %v624 = vld [vmem:[%s623] ss:$2 sm:$0xff]
    %s625 = scalar_lea.vmem [#allocation2], 24
    %v626 = vld [vmem:[%s625] ss:$2 sm:$0xff]
    %s627 = scalar_lea.vmem [#allocation2], 9
    %v628 = vld [vmem:[%s627] ss:$2 sm:$0xff]
    %s629 = scalar_lea.vmem [#allocation2], 25
    %v630 = vld [vmem:[%s629] ss:$2 sm:$0xff]
    %v631 = vld [vmem:[%s11] sm:$0xff]
    %v632 = vld [vmem:[%s11 + $0x8] sm:$0xff]
    %v633 = vld [vmem:[%s11 + $0x10] sm:$0xff]
    %v634 = vld [vmem:[%s11 + $0x18] sm:$0xff]
    %v635 = vld [vmem:[%s11 + $0x20] sm:$0xff]
    %v636 = vld [vmem:[%s11 + $0x28] sm:$0xff]
    %v637 = vld [vmem:[%s11 + $0x30] sm:$0xff]
    %v638 = vld [vmem:[%s11 + $0x38] sm:$0xff]
    %v639 = vld [vmem:[%s11 + $0x40] sm:$0xff]
    %v640 = vld [vmem:[%s11 + $0x48] sm:$0xff]
    %v641 = vld [vmem:[%s11 + $0x50] sm:$0xff]
    %v642 = vld [vmem:[%s11 + $0x58] sm:$0xff]
    %v643 = vld [vmem:[%s11 + $0x60] sm:$0xff]
    %v644 = vld [vmem:[%s11 + $0x68] sm:$0xff]
    %v645 = vld [vmem:[%s11 + $0x70] sm:$0xff]
    %v646 = vld [vmem:[%s11 + $0x78] sm:$0xff]
    %v647 = vld [vmem:[%s13 + $0x5] sm:$0x1]
    %v648 = vperm.slane %v647, 0
    %649 = vmatpush.msra.mxu0 %v646
    %650 = vmatpush.msra.mxu0 %v645
    %651 = vmatpush.msra.mxu0 %v644
    %652 = vmatpush.msra.mxu0 %v643
    %653 = vmatpush.msra.mxu0 %v642
    %654 = vmatpush.msra.mxu0 %v641
    %655 = vmatpush.msra.mxu0 %v640
    %656 = vmatpush.msra.mxu0 %v639
    %657 = vmatpush.msra.mxu0 %v638
    %658 = vmatpush.msra.mxu0 %v637
    %659 = vmatpush.msra.mxu0 %v636
    %660 = vmatpush.msra.mxu0 %v635
    %661 = vmatpush.msra.mxu0 %v634
    %662 = vmatpush.msra.mxu0 %v633
    %663 = vmatpush.msra.mxu0 %v632
    %664 = vmatpush.msra.mxu0 %v631
    %665 = vmatmul.f32.gmra.mxu0 %v624
    %v666 = vpop.f32.mrf.mxu0
    %v667 = vadd.f32 %v648, %v666
    %668 = vmatmul.f32.gmra.mxu0 %v626
    %v669 = vpop.f32.mrf.mxu0
    %v670 = vadd.f32 %v648, %v669
    %671 = vdwg.mxu0
    %v672 = vld [vmem:[%s9] sm:$0xff]
    %v673 = vld [vmem:[%s9 + $0x8] sm:$0xff]
    %v674 = vld [vmem:[%s9 + $0x10] sm:$0xff]
    %v675 = vld [vmem:[%s9 + $0x18] sm:$0xff]
    %v676 = vld [vmem:[%s9 + $0x20] sm:$0xff]
    %v677 = vld [vmem:[%s9 + $0x28] sm:$0xff]
    %v678 = vld [vmem:[%s9 + $0x30] sm:$0xff]
    %v679 = vld [vmem:[%s9 + $0x38] sm:$0xff]
    %v680 = vld [vmem:[%s9 + $0x40] sm:$0xff]
    %v681 = vld [vmem:[%s9 + $0x48] sm:$0xff]
    %v682 = vld [vmem:[%s9 + $0x50] sm:$0xff]
    %v683 = vld [vmem:[%s9 + $0x58] sm:$0xff]
    %v684 = vld [vmem:[%s9 + $0x60] sm:$0xff]
    %v685 = vld [vmem:[%s9 + $0x68] sm:$0xff]
    %v686 = vld [vmem:[%s9 + $0x70] sm:$0xff]
    %v687 = vld [vmem:[%s9 + $0x78] sm:$0xff]
    %v688 = vld [vmem:[%s9 + $0x80] sm:$0xff]
    %v689 = vld [vmem:[%s9 + $0x88] sm:$0xff]
    %v690 = vld [vmem:[%s9 + $0x90] sm:$0xff]
    %v691 = vld [vmem:[%s9 + $0x98] sm:$0xff]
    %v692 = vld [vmem:[%s9 + $0xa0] sm:$0xff]
    %v693 = vld [vmem:[%s9 + $0xa8] sm:$0xff]
    %v694 = vld [vmem:[%s9 + $0xb0] sm:$0xff]
    %v695 = vld [vmem:[%s9 + $0xb8] sm:$0xff]
    %v696 = vld [vmem:[%s9 + $0xc0] sm:$0xff]
    %v697 = vld [vmem:[%s9 + $0xc8] sm:$0xff]
    %v698 = vld [vmem:[%s9 + $0xd0] sm:$0xff]
    %v699 = vld [vmem:[%s9 + $0xd8] sm:$0xff]
    %v700 = vld [vmem:[%s9 + $0xe0] sm:$0xff]
    %v701 = vld [vmem:[%s9 + $0xe8] sm:$0xff]
    %v702 = vld [vmem:[%s9 + $0xf0] sm:$0xff]
    %v703 = vld [vmem:[%s9 + $0xf8] sm:$0xff]
    %v704 = vld [vmem:[%s9 + $0x100] sm:$0xff]
    %v705 = vld [vmem:[%s9 + $0x108] sm:$0xff]
    %v706 = vld [vmem:[%s9 + $0x110] sm:$0xff]
    %v707 = vld [vmem:[%s9 + $0x118] sm:$0xff]
    %v708 = vld [vmem:[%s9 + $0x120] sm:$0xff]
    %v709 = vld [vmem:[%s9 + $0x128] sm:$0xff]
    %v710 = vld [vmem:[%s9 + $0x130] sm:$0xff]
    %v711 = vld [vmem:[%s9 + $0x138] sm:$0xff]
    %v712 = vld [vmem:[%s9 + $0x140] sm:$0xff]
    %v713 = vld [vmem:[%s9 + $0x148] sm:$0xff]
    %v714 = vld [vmem:[%s9 + $0x150] sm:$0xff]
    %v715 = vld [vmem:[%s9 + $0x158] sm:$0xff]
    %v716 = vld [vmem:[%s9 + $0x160] sm:$0xff]
    %v717 = vld [vmem:[%s9 + $0x168] sm:$0xff]
    %v718 = vld [vmem:[%s9 + $0x170] sm:$0xff]
    %v719 = vld [vmem:[%s9 + $0x178] sm:$0xff]
    %v720 = vld [vmem:[%s13 + $0x3] sm:$0x1]
    %v721 = vperm.slane %v720, 0
    %722 = vmatpush.msra.mxu0 %v687
    %723 = vmatpush.msra.mxu0 %v686
    %724 = vmatpush.msra.mxu0 %v685
    %725 = vmatpush.msra.mxu0 %v684
    %726 = vmatpush.msra.mxu0 %v683
    %727 = vmatpush.msra.mxu0 %v682
    %728 = vmatpush.msra.mxu0 %v681
    %729 = vmatpush.msra.mxu0 %v680
    %730 = vmatpush.msra.mxu0 %v679
    %731 = vmatpush.msra.mxu0 %v678
    %732 = vmatpush.msra.mxu0 %v677
    %733 = vmatpush.msra.mxu0 %v676
    %734 = vmatpush.msra.mxu0 %v675
    %735 = vmatpush.msra.mxu0 %v674
    %736 = vmatpush.msra.mxu0 %v673
    %737 = vmatpush.msra.mxu0 %v672
    %738 = vmatmul.f32.gmra.mxu0 %v621
    %v739 = vpop.f32.mrf.mxu0
    %v740 = vadd.f32 %v721, %v739
    %741 = vmatmul.f32.gmra.mxu0 %v622
    %v742 = vpop.f32.mrf.mxu0
    %v743 = vadd.f32 %v721, %v742
    %744 = vdwg.mxu0
    %745 = vmatpush.msra.mxu0 %v703
    %746 = vmatpush.msra.mxu0 %v702
    %747 = vmatpush.msra.mxu0 %v701
    %748 = vmatpush.msra.mxu0 %v700
    %749 = vmatpush.msra.mxu0 %v699
    %750 = vmatpush.msra.mxu0 %v698
    %751 = vmatpush.msra.mxu0 %v697
    %752 = vmatpush.msra.mxu0 %v696
    %753 = vmatpush.msra.mxu0 %v695
    %754 = vmatpush.msra.mxu0 %v694
    %755 = vmatpush.msra.mxu0 %v693
    %756 = vmatpush.msra.mxu0 %v692
    %757 = vmatpush.msra.mxu0 %v691
    %758 = vmatpush.msra.mxu0 %v690
    %759 = vmatpush.msra.mxu0 %v689
    %760 = vmatpush.msra.mxu0 %v688
    %761 = vmatmul.f32.gmra.mxu0 %v624
    %v762 = vpop.f32.mrf.mxu0
    %v763 = vadd.f32 %v740, %v762
    %764 = vmatmul.f32.gmra.mxu0 %v626
    %v765 = vpop.f32.mrf.mxu0
    %v766 = vadd.f32 %v743, %v765
    %767 = vdwg.mxu0
    %768 = vmatpush.msra.mxu0 %v719
    %769 = vmatpush.msra.mxu0 %v718
    %770 = vmatpush.msra.mxu0 %v717
    %771 = vmatpush.msra.mxu0 %v716
    %772 = vmatpush.msra.mxu0 %v715
    %773 = vmatpush.msra.mxu0 %v714
    %774 = vmatpush.msra.mxu0 %v713
    %775 = vmatpush.msra.mxu0 %v712
    %776 = vmatpush.msra.mxu0 %v711
    %777 = vmatpush.msra.mxu0 %v710
    %778 = vmatpush.msra.mxu0 %v709
    %779 = vmatpush.msra.mxu0 %v708
    %780 = vmatpush.msra.mxu0 %v707
    %781 = vmatpush.msra.mxu0 %v706
    %782 = vmatpush.msra.mxu0 %v705
    %783 = vmatpush.msra.mxu0 %v704
    %784 = vmatmul.f32.gmra.mxu0 %v628
    %v785 = vpop.f32.mrf.mxu0
    %v786 = vadd.f32 %v763, %v785
    %787 = vmatmul.f32.gmra.mxu0 %v630
    %v788 = vpop.f32.mrf.mxu0
    %v789 = vadd.f32 %v766, %v788
    %790 = vdwg.mxu0
    %v791 = vmax.f32 %v786, 0.0
    %v792 = vmax.f32 %v789, 0.0
    %793 = vst [vmem:[#allocation3 + $0x8] sm:$0xff] %v791
    %794 = vst [vmem:[#allocation3 + $0x10] sm:$0xff] %v792
    %v795 = vld [vmem:[%s13 + $0x4] sm:$0x1]
    %v796 = vld [vmem:[#allocation3 + $0x7] sm:$0xff]
    %v797 = vld [vmem:[#allocation3 + $0xf] sm:$0xff]
    %v798 = vmul.f32 %v796, %v614
    %v799 = vmul.f32 %v797, %v619
    %v800 = vld [vmem:[#allocation3 + $0x9] sm:$0xff]
    %v801 = vld [vmem:[#allocation3 + $0x11] sm:$0xff]
    %802 = vset.pattern.permute.xlu0 1
    %803 = vperm.xlu0 %802, %v52
    %v804 = vpop.permute.xlu0 %803
    %806 = vset.pattern.permute.xlu0 1
    %807 = vperm.xlu0 %806, %v53
    %v808 = vpop.permute.xlu0 %807
    %v810 = vmul.f32 %v800, %v804
    %v811 = vmul.f32 %v801, %v808
    %v812 = vld [vmem:[%s10] sm:$0xff]
    %v813 = vld [vmem:[%s10 + $0x8] sm:$0xff]
    %v814 = vld [vmem:[%s10 + $0x10] sm:$0xff]
    %v815 = vld [vmem:[%s10 + $0x18] sm:$0xff]
    %v816 = vld [vmem:[%s10 + $0x20] sm:$0xff]
    %v817 = vld [vmem:[%s10 + $0x28] sm:$0xff]
    %v818 = vld [vmem:[%s10 + $0x30] sm:$0xff]
    %v819 = vld [vmem:[%s10 + $0x38] sm:$0xff]
    %v820 = vld [vmem:[%s10 + $0x40] sm:$0xff]
    %v821 = vld [vmem:[%s10 + $0x48] sm:$0xff]
    %v822 = vld [vmem:[%s10 + $0x50] sm:$0xff]
    %v823 = vld [vmem:[%s10 + $0x58] sm:$0xff]
    %v824 = vld [vmem:[%s10 + $0x60] sm:$0xff]
    %v825 = vld [vmem:[%s10 + $0x68] sm:$0xff]
    %v826 = vld [vmem:[%s10 + $0x70] sm:$0xff]
    %v827 = vld [vmem:[%s10 + $0x78] sm:$0xff]
    %v828 = vld [vmem:[%s10 + $0x80] sm:$0xff]
    %v829 = vld [vmem:[%s10 + $0x88] sm:$0xff]
    %v830 = vld [vmem:[%s10 + $0x90] sm:$0xff]
    %v831 = vld [vmem:[%s10 + $0x98] sm:$0xff]
    %v832 = vld [vmem:[%s10 + $0xa0] sm:$0xff]
    %v833 = vld [vmem:[%s10 + $0xa8] sm:$0xff]
    %v834 = vld [vmem:[%s10 + $0xb0] sm:$0xff]
    %v835 = vld [vmem:[%s10 + $0xb8] sm:$0xff]
    %v836 = vld [vmem:[%s10 + $0xc0] sm:$0xff]
    %v837 = vld [vmem:[%s10 + $0xc8] sm:$0xff]
    %v838 = vld [vmem:[%s10 + $0xd0] sm:$0xff]
    %v839 = vld [vmem:[%s10 + $0xd8] sm:$0xff]
    %v840 = vld [vmem:[%s10 + $0xe0] sm:$0xff]
    %v841 = vld [vmem:[%s10 + $0xe8] sm:$0xff]
    %v842 = vld [vmem:[%s10 + $0xf0] sm:$0xff]
    %v843 = vld [vmem:[%s10 + $0xf8] sm:$0xff]
    %v844 = vld [vmem:[%s10 + $0x100] sm:$0xff]
    %v845 = vld [vmem:[%s10 + $0x108] sm:$0xff]
    %v846 = vld [vmem:[%s10 + $0x110] sm:$0xff]
    %v847 = vld [vmem:[%s10 + $0x118] sm:$0xff]
    %v848 = vld [vmem:[%s10 + $0x120] sm:$0xff]
    %v849 = vld [vmem:[%s10 + $0x128] sm:$0xff]
    %v850 = vld [vmem:[%s10 + $0x130] sm:$0xff]
    %v851 = vld [vmem:[%s10 + $0x138] sm:$0xff]
    %v852 = vld [vmem:[%s10 + $0x140] sm:$0xff]
    %v853 = vld [vmem:[%s10 + $0x148] sm:$0xff]
    %v854 = vld [vmem:[%s10 + $0x150] sm:$0xff]
    %v855 = vld [vmem:[%s10 + $0x158] sm:$0xff]
    %v856 = vld [vmem:[%s10 + $0x160] sm:$0xff]
    %v857 = vld [vmem:[%s10 + $0x168] sm:$0xff]
    %v858 = vld [vmem:[%s10 + $0x170] sm:$0xff]
    %v859 = vld [vmem:[%s10 + $0x178] sm:$0xff]
    %v860 = vperm.slane %v795, 0
    %861 = vmatpush.msra.mxu0 %v827
    %862 = vmatpush.msra.mxu0 %v826
    %863 = vmatpush.msra.mxu0 %v825
    %864 = vmatpush.msra.mxu0 %v824
    %865 = vmatpush.msra.mxu0 %v823
    %866 = vmatpush.msra.mxu0 %v822
    %867 = vmatpush.msra.mxu0 %v821
    %868 = vmatpush.msra.mxu0 %v820
    %869 = vmatpush.msra.mxu0 %v819
    %870 = vmatpush.msra.mxu0 %v818
    %871 = vmatpush.msra.mxu0 %v817
    %872 = vmatpush.msra.mxu0 %v816
    %873 = vmatpush.msra.mxu0 %v815
    %874 = vmatpush.msra.mxu0 %v814
    %875 = vmatpush.msra.mxu0 %v813
    %876 = vmatpush.msra.mxu0 %v812
    %877 = vmatmul.f32.gmra.mxu0 %v798
    %v878 = vpop.f32.mrf.mxu0
    %v879 = vadd.f32 %v860, %v878
    %880 = vmatmul.f32.gmra.mxu0 %v799
    %v881 = vpop.f32.mrf.mxu0
    %v882 = vadd.f32 %v860, %v881
    %883 = vdwg.mxu0
    %884 = vmatpush.msra.mxu0 %v843
    %885 = vmatpush.msra.mxu0 %v842
    %886 = vmatpush.msra.mxu0 %v841
    %887 = vmatpush.msra.mxu0 %v840
    %888 = vmatpush.msra.mxu0 %v839
    %889 = vmatpush.msra.mxu0 %v838
    %890 = vmatpush.msra.mxu0 %v837
    %891 = vmatpush.msra.mxu0 %v836
    %892 = vmatpush.msra.mxu0 %v835
    %893 = vmatpush.msra.mxu0 %v834
    %894 = vmatpush.msra.mxu0 %v833
    %895 = vmatpush.msra.mxu0 %v832
    %896 = vmatpush.msra.mxu0 %v831
    %897 = vmatpush.msra.mxu0 %v830
    %898 = vmatpush.msra.mxu0 %v829
    %899 = vmatpush.msra.mxu0 %v828
    %900 = vmatmul.f32.gmra.mxu0 %v791
    %v901 = vpop.f32.mrf.mxu0
    %v902 = vadd.f32 %v879, %v901
    %903 = vmatmul.f32.gmra.mxu0 %v792
    %v904 = vpop.f32.mrf.mxu0
    %v905 = vadd.f32 %v882, %v904
    %906 = vdwg.mxu0
    %907 = vmatpush.msra.mxu0 %v859
    %908 = vmatpush.msra.mxu0 %v858
    %909 = vmatpush.msra.mxu0 %v857
    %910 = vmatpush.msra.mxu0 %v856
    %911 = vmatpush.msra.mxu0 %v855
    %912 = vmatpush.msra.mxu0 %v854
    %913 = vmatpush.msra.mxu0 %v853
    %914 = vmatpush.msra.mxu0 %v852
    %915 = vmatpush.msra.mxu0 %v851
    %916 = vmatpush.msra.mxu0 %v850
    %917 = vmatpush.msra.mxu0 %v849
    %918 = vmatpush.msra.mxu0 %v848
    %919 = vmatpush.msra.mxu0 %v847
    %920 = vmatpush.msra.mxu0 %v846
    %921 = vmatpush.msra.mxu0 %v845
    %922 = vmatpush.msra.mxu0 %v844
    %923 = vmatmul.f32.gmra.mxu0 %v810
    %v924 = vpop.f32.mrf.mxu0
    %v925 = vadd.f32 %v902, %v924
    %926 = vmatmul.f32.gmra.mxu0 %v811
    %v927 = vpop.f32.mrf.mxu0
    %v928 = vadd.f32 %v905, %v927
    %929 = vdwg.mxu0
    %v930 = vadd.f32 %v925, %v667
    %v931 = vadd.f32 %v928, %v670
    %v932 = vmax.f32 %v930, 0.0
    %v933 = vmax.f32 %v931, 0.0
    %v934 = vld [vmem:[%s3] sm:$0xff]
    %v935 = vld [vmem:[%s3 + $0x8] sm:$0xff]
    %v936 = vmul.f32 %v932, %v934
    %v937 = vmul.f32 %v933, %v935
    %v938 = vrot.slane %v936, 4
    %v939 = vadd.f32 %v936, %v938
    %v940 = vrot.slane %v939, 2
    %v941 = vadd.f32 %v939, %v940
    %v942 = vrot.slane %v941, 1
    %v943 = vadd.f32 %v941, %v942
    %v944 = vrot.slane %v937, 4
    %v945 = vadd.f32 %v937, %v944
    %v946 = vrot.slane %v945, 2
    %v947 = vadd.f32 %v945, %v946
    %v948 = vrot.slane %v947, 1
    %v949 = vadd.f32 %v947, %v948
    %v950 = vld [vmem:[%s12] sm:$0xff]
    %v951 = vld [vmem:[%s12 + $0x8] sm:$0xff]
    %v952 = vld [vmem:[%s12 + $0x10] sm:$0xff]
    %v953 = vld [vmem:[%s12 + $0x18] sm:$0xff]
    %v954 = vld [vmem:[%s12 + $0x20] sm:$0xff]
    %v955 = vld [vmem:[%s12 + $0x28] sm:$0xff]
    %v956 = vld [vmem:[%s12 + $0x30] sm:$0xff]
    %v957 = vld [vmem:[%s12 + $0x38] sm:$0xff]
    %v958 = vld [vmem:[%s12 + $0x40] sm:$0xff]
    %v959 = vld [vmem:[%s12 + $0x48] sm:$0xff]
    %v960 = vld [vmem:[%s12 + $0x50] sm:$0xff]
    %v961 = vld [vmem:[%s12 + $0x58] sm:$0xff]
    %v962 = vld [vmem:[%s12 + $0x60] sm:$0xff]
    %v963 = vld [vmem:[%s12 + $0x68] sm:$0xff]
    %v964 = vld [vmem:[%s12 + $0x70] sm:$0xff]
    %v965 = vld [vmem:[%s12 + $0x78] sm:$0xff]
    %v966 = vld [vmem:[%s13 + $0x6] sm:$0x1]
    %v967 = vperm.slane %v966, 0
    %vm970 = vcmask 1041409
    %v971 = vsel %vm970, %v949, %v943
    %973 = vmatpush.msra.mxu0 %v965
    %974 = vmatpush.msra.mxu0 %v964
    %975 = vmatpush.msra.mxu0 %v963
    %976 = vmatpush.msra.mxu0 %v962
    %977 = vmatpush.msra.mxu0 %v961
    %978 = vmatpush.msra.mxu0 %v960
    %979 = vmatpush.msra.mxu0 %v959
    %980 = vmatpush.msra.mxu0 %v958
    %981 = vmatpush.msra.mxu0 %v957
    %982 = vmatpush.msra.mxu0 %v956
    %983 = vmatpush.msra.mxu0 %v955
    %984 = vmatpush.msra.mxu0 %v954
    %985 = vmatpush.msra.mxu0 %v953
    %986 = vmatpush.msra.mxu0 %v952
    %987 = vmatpush.msra.mxu0 %v951
    %988 = vmatpush.msra.mxu0 %v950
    %989 = vmatmul.f32.gmra.mxu0 %v971
    %v990 = vpop.f32.mrf.mxu0
    %v991 = vadd.f32 %v967, %v990
    %992 = vdwg.mxu0
    %993 = vst [vmem:[#allocation4] sm:$0x3] %v991
    // Predicated region
    $region58: #{fast_learner_forward.1} parent=1 // pred_check
      _
    $region59: #{fast_learner_forward.1} parent=1 // pred_check_branch
      %995 = sbr.rel (0) target = $region61
    $region60: #{fast_learner_forward.1} parent=1 // pred_region
      %997 = vsyncadd [#allocation5], 0
      %s999 = sshll.u32 [#allocation4], 4
      %s1000 = int_to_ptr.vmem [resolvable:$true] %s999
      %s1001 = sshll.u32 %s14, 4
      %s1002 = int_to_ptr.hbm [resolvable:$true] %s1001
      %1004 = dma.vmem_to_hbm [thread:$0]  %s1000, 32, %s1002, [#allocation5]
    $region61: #{fast_learner_forward.1} parent=1 // pred_fallthru
      _
    // Predicated region
    $region62: #{fast_learner_forward.1} parent=1 // pred_check
      _
    $region63: #{fast_learner_forward.1} parent=1 // pred_check_branch
      %1006 = sbr.rel (0) target = $region65
    $region64: #{fast_learner_forward.1} parent=1 // pred_region
      %1008 = dma.done [#allocation5], 32
    $region65: #{fast_learner_forward.1} parent=1 // pred_fallthru
      _
    %1009 = vsyncpa [#allocation5], 1

</llo_original>
